<compile_context>
chip_gen: v6e
topology: v6e:2x2x1
jax: 0.10.0
libtpu: 0.0.40
codegen_flags: <defaults>
</compile_context>

<pallas_src>
import functools

import jax
import jax.numpy as jnp
from jax import lax
from jax.experimental import pallas as pl
from jax.experimental.pallas import tpu as pltpu

EPS = 1e-5
LANES = 128

_PARALLEL = pltpu.CompilerParams(dimension_semantics=("parallel",))


# ------------------------------ Pallas kernels ------------------------------

def conv_stats_kernel(x_ref, w_ref, y_ref, st_ref):
    """One M-tile: y = x @ w (MXU, f32 acc) + per-tile BN partial stats."""
    y = jnp.dot(x_ref[...], w_ref[...], preferred_element_type=jnp.float32)
    y_ref[...] = y
    st_ref[...] = jnp.concatenate(
        [jnp.sum(y, axis=0, keepdims=True),
         jnp.sum(y * y, axis=0, keepdims=True)], axis=0)


def conv_pair_stats_kernel(x2_ref, w2_ref, xs_ref, wbl_ref,
                           y2_ref, ys_ref, st2_ref, stbl_ref):
    """conv2 (3x3 as matmul) and the 1x1-stride-2 skip conv fused over the same
    M-tile, each with its own BN partial-stats accumulator."""
    y2 = jnp.dot(x2_ref[...], w2_ref[...], preferred_element_type=jnp.float32)
    ys = jnp.dot(xs_ref[...], wbl_ref[...], preferred_element_type=jnp.float32)
    y2_ref[...] = y2
    ys_ref[...] = ys
    st2_ref[...] = jnp.concatenate(
        [jnp.sum(y2, axis=0, keepdims=True),
         jnp.sum(y2 * y2, axis=0, keepdims=True)], axis=0)
    stbl_ref[...] = jnp.concatenate(
        [jnp.sum(ys, axis=0, keepdims=True),
         jnp.sum(ys * ys, axis=0, keepdims=True)], axis=0)


def bn_relu_kernel(y_ref, sc_ref, sh_ref, o_ref):
    o_ref[...] = jnp.maximum(y_ref[...] * sc_ref[...] + sh_ref[...],
                             0.0).astype(o_ref.dtype)


def bn_add_relu_kernel(y_ref, skip_ref, sc_ref, sh_ref, o_ref):
    o_ref[...] = jnp.maximum(
        y_ref[...] * sc_ref[...] + sh_ref[...] + skip_ref[...],
        0.0).astype(o_ref.dtype)


def bn2_bnbl_add_relu_kernel(y2_ref, ys_ref, s2_ref, t2_ref, ss_ref, ts_ref,
                             o_ref):
    o_ref[...] = jnp.maximum(
        y2_ref[...] * s2_ref[...] + t2_ref[...]
        + ys_ref[...] * ss_ref[...] + ts_ref[...],
        0.0).astype(o_ref.dtype)


# ------------------------- pallas_call wrappers ------------------------------

def _row_spec(tm, d):
    return pl.BlockSpec((tm, d), lambda i: (i, 0))


def _pin_spec(shape):
    return pl.BlockSpec(shape, lambda i, _n=len(shape): (0,) * _n)


def _stats_spec(cp):
    # (G, 2, Cp) array, one (2, Cp) partial-stats block per grid step.
    return pl.BlockSpec((None, 2, cp), lambda i: (i, 0, 0))


def _conv_stats(X, Wm, tm):
    Mp, K = X.shape
    Cp = Wm.shape[1]
    G = Mp // tm
    return pl.pallas_call(
        conv_stats_kernel,
        out_shape=(jax.ShapeDtypeStruct((Mp, Cp), jnp.float32),
                   jax.ShapeDtypeStruct((G, 2, Cp), jnp.float32)),
        grid=(G,),
        in_specs=[_row_spec(tm, K), _pin_spec((K, Cp))],
        out_specs=(_row_spec(tm, Cp), _stats_spec(Cp)),
        compiler_params=_PARALLEL,
    )(X, Wm)


def _conv_pair_stats(X2, W2m, Xs, Wblm, tm):
    Mp, K2 = X2.shape
    Cin = Xs.shape[1]
    Cp = W2m.shape[1]
    G = Mp // tm
    return pl.pallas_call(
        conv_pair_stats_kernel,
        out_shape=(jax.ShapeDtypeStruct((Mp, Cp), jnp.float32),
                   jax.ShapeDtypeStruct((Mp, Cp), jnp.float32),
                   jax.ShapeDtypeStruct((G, 2, Cp), jnp.float32),
                   jax.ShapeDtypeStruct((G, 2, Cp), jnp.float32)),
        grid=(G,),
        in_specs=[_row_spec(tm, K2), _pin_spec((K2, Cp)),
                  _row_spec(tm, Cin), _pin_spec((Cin, Cp))],
        out_specs=(_row_spec(tm, Cp), _row_spec(tm, Cp),
                   _stats_spec(Cp), _stats_spec(Cp)),
        compiler_params=_PARALLEL,
    )(X2, W2m, Xs, Wblm)


def _bn_relu(Y, sc, sh, tm, out_dtype):
    Mp, Cp = Y.shape
    return pl.pallas_call(
        bn_relu_kernel,
        out_shape=jax.ShapeDtypeStruct((Mp, Cp), out_dtype),
        grid=(Mp // tm,),
        in_specs=[_row_spec(tm, Cp), _pin_spec((1, Cp)), _pin_spec((1, Cp))],
        out_specs=_row_spec(tm, Cp),
        compiler_params=_PARALLEL,
    )(Y, sc, sh)


def _bn_add_relu(Y, skip, sc, sh, tm):
    Mp, Cp = Y.shape
    return pl.pallas_call(
        bn_add_relu_kernel,
        out_shape=jax.ShapeDtypeStruct((Mp, Cp), jnp.float32),
        grid=(Mp // tm,),
        in_specs=[_row_spec(tm, Cp), _row_spec(tm, Cp),
                  _pin_spec((1, Cp)), _pin_spec((1, Cp))],
        out_specs=_row_spec(tm, Cp),
        compiler_params=_PARALLEL,
    )(Y, skip, sc, sh)


def _bn2_bnbl_add_relu(Y2, Ys, s2, t2, ss, ts, tm):
    Mp, Cp = Y2.shape
    return pl.pallas_call(
        bn2_bnbl_add_relu_kernel,
        out_shape=jax.ShapeDtypeStruct((Mp, Cp), jnp.float32),
        grid=(Mp // tm,),
        in_specs=[_row_spec(tm, Cp), _row_spec(tm, Cp),
                  _pin_spec((1, Cp)), _pin_spec((1, Cp)),
                  _pin_spec((1, Cp)), _pin_spec((1, Cp))],
        out_specs=_row_spec(tm, Cp),
        compiler_params=_PARALLEL,
    )(Y2, Ys, s2, t2, ss, ts)


# --------------------------------- glue -------------------------------------

def _round_up(v, m):
    return (v + m - 1) // m * m


def _im2col(x_nhwc, ksize, stride, pad):
    # TODO(synk): replace wrapper-side im2col with in-kernel halo-row DMA and 9
    # accumulated per-tap matmuls to cut the ~9x HBM inflation of the patches.
    N, H, W, C = x_nhwc.shape
    xp = jnp.pad(x_nhwc, ((0, 0), (pad, pad), (pad, pad), (0, 0)))
    Ho = (H + 2 * pad - ksize) // stride + 1
    Wo = (W + 2 * pad - ksize) // stride + 1
    cols = []
    for kh in range(ksize):
        for kw in range(ksize):
            patch = xp[:, kh:kh + stride * Ho:stride,
                       kw:kw + stride * Wo:stride, :]
            cols.append(patch.reshape(N * Ho * Wo, C))
    return jnp.concatenate(cols, axis=1), (Ho, Wo)


def _wmat(w, cp):
    """(Cout,Cin,kh,kw) -> (kh*kw*Cin, Cp) bf16, zero-padded to lane-dense Cp."""
    cout, cin, kh, kw = w.shape
    wm = jnp.transpose(w, (2, 3, 1, 0)).reshape(kh * kw * cin, cout)
    return jnp.pad(wm, ((0, 0), (0, cp - cout))).astype(jnp.bfloat16)


def _pad_vec(v, cp):
    return jnp.pad(v.astype(jnp.float32), (0, cp - v.shape[0]))


def _pad_rows(a, mp):
    m = a.shape[0]
    return a if m == mp else jnp.pad(a, ((0, mp - m), (0, 0)))


def _scale_shift(st, gamma_p, beta_p, m_real):
    """Reduce per-tile (sum, sumsq) partials and fold BN into scale/shift.
    var = E[y^2] - E[y]^2 (biased, matching PyTorch train-mode BN)."""
    s = jnp.sum(st[:, 0, :], axis=0)
    sq = jnp.sum(st[:, 1, :], axis=0)
    mean = s / m_real
    var = jnp.maximum(sq / m_real - mean * mean, 0.0)
    scale = gamma_p * lax.rsqrt(var + EPS)
    shift = beta_p - mean * scale
    return scale.reshape(1, -1), shift.reshape(1, -1)


@functools.partial(jax.jit, static_argnames=("bot_layer", "tm_target"))
def res_unit_forward(x_nchw, params, bot_layer, tm_target=256):
    # tm_target: rows per M-tile. Raise to 512-1024 on v5e/v6e (128 MiB VMEM);
    # keep 256-512 on v7x (64 MiB VMEM, 2 TCs fed via the "parallel" M axis).
    x = jnp.transpose(x_nchw, (0, 2, 3, 1)).astype(jnp.float32)   # NHWC
    N, H, W, Cin = x.shape
    stride = 2 if bot_layer else 1
    Cout = params["w1"].shape[0]
    Cp = _round_up(Cout, LANES)            # lane-dense output channels

    # Weight matrices / BN affine params.  Conv bias is intentionally dropped:
    # a per-channel constant cancels exactly under train-mode BN.
    w1m = _wmat(params["w1"], Cp)
    w2m = _wmat(params["w2"], Cp)
    g1, be1 = _pad_vec(params["g1"], Cp), _pad_vec(params["be1"], Cp)
    g2, be2 = _pad_vec(params["g2"], Cp), _pad_vec(params["be2"], Cp)

    # ---- stage 1: conv3x3 (stride 2|1, pad 1) -> BN1 -> ReLU ----
    X1, (Ho, Wo) = _im2col(x, 3, stride, 1)
    M = N * Ho * Wo
    tm = min(tm_target, _round_up(M, 8))
    Mp = _round_up(M, tm)                  # zero-pad rows: exact for sum/sumsq
    X1 = _pad_rows(X1, Mp).astype(jnp.bfloat16)
    Y1, st1 = _conv_stats(X1, w1m, tm)
    sc1, sh1 = _scale_shift(st1, g1, be1, M)
    out1 = _bn_relu(Y1, sc1, sh1, tm, jnp.bfloat16)          # (Mp, Cp) bf16

    # ---- stage 2: conv3x3 s1 -> BN2, skip path, add, ReLU ----
    out1_nhwc = out1[:M, :Cout].reshape(N, Ho, Wo, Cout)     # bf16
    # TODO(synk): keep a tiled NHWC layout between the two convs (halo scheme)
    # instead of this HBM round-trip + re-im2col.
    X2, _ = _im2col(out1_nhwc, 3, 1, 1)
    X2 = _pad_rows(X2, Mp).astype(jnp.bfloat16)

    if bot_layer:
        wblm = jnp.pad(params["wbl"].reshape(Cout, Cin).T,
                       ((0, 0), (0, Cp - Cout))).astype(jnp.bfloat16)
        gbl, bebl = _pad_vec(params["gbl"], Cp), _pad_vec(params["bebl"], Cp)
        Xs = _pad_rows(x[:, ::2, ::2, :].reshape(M, Cin), Mp).astype(jnp.bfloat16)
        Y2, Ys, st2, stbl = _conv_pair_stats(X2, w2m, Xs, wblm, tm)
        sc2, sh2 = _scale_shift(st2, g2, be2, M)
        scs, shs = _scale_shift(stbl, gbl, bebl, M)
        out = _bn2_bnbl_add_relu(Y2, Ys, sc2, sh2, scs, shs, tm)
    else:
        # identity skip (requires Cin == Cout, as in PyTorch)
        skip = _pad_rows(jnp.pad(x.reshape(M, Cin), ((0, 0), (0, Cp - Cin))), Mp)
        Y2, st2 = _conv_stats(X2, w2m, tm)
        sc2, sh2 = _scale_shift(st2, g2, be2, M)
        out = _bn_add_relu(Y2, skip, sc2, sh2, tm)

    out = out[:M, :Cout].reshape(N, Ho, Wo, Cout)
    return jnp.transpose(out, (0, 3, 1, 2))                   # back to NCHW


# ----------------------- pure-JAX reference (for check) ----------------------

def _conv_ref(x_nhwc, w, b, stride, pad):
    w_hwio = jnp.transpose(w, (2, 3, 1, 0))
    y = lax.conv_general_dilated(x_nhwc, w_hwio, (stride, stride),
                                 [(pad, pad), (pad, pad)],
                                 dimension_numbers=("NHWC", "HWIO", "NHWC"))
    return y + b.reshape(1, 1, 1, -1)


def _bn_ref(y, g, b):
    mu = jnp.mean(y, axis=(0, 1, 2), keepdims=True)
    var = jnp.mean((y - mu) ** 2, axis=(0, 1, 2), keepdims=True)
    return (y - mu) * lax.rsqrt(var + EPS) * g.reshape(1, 1, 1, -1) + b.reshape(1, 1, 1, -1)


def res_unit_ref(x_nchw, p, bot_layer):
    x = jnp.transpose(x_nchw, (0, 2, 3, 1)).astype(jnp.float32)
    stride = 2 if bot_layer else 1
    out = jax.nn.relu(_bn_ref(_conv_ref(x, p["w1"], p["b1"], stride, 1), p["g1"], p["be1"]))
    out = _bn_ref(_conv_ref(out, p["w2"], p["b2"], 1, 1), p["g2"], p["be2"])
    skip = _bn_ref(_conv_ref(x, p["wbl"], p["bbl"], 2, 0), p["gbl"], p["bebl"]) if bot_layer else x
    out = jax.nn.relu(out + skip)
    return jnp.transpose(out, (0, 3, 1, 2))


# --------------------------------- main --------------------------------------

def init_params(cin, cout, key):
    ks = jax.random.split(key, 12)
    s = 0.1
    return dict(
        w1=s * jax.random.normal(ks[0], (cout, cin, 3, 3), jnp.float32),
        b1=s * jax.random.normal(ks[1], (cout,), jnp.float32),
        g1=1.0 + 0.1 * jax.random.normal(ks[2], (cout,), jnp.float32),
        be1=0.1 * jax.random.normal(ks[3], (cout,), jnp.float32),
        w2=s * jax.random.normal(ks[4], (cout, cout, 3, 3), jnp.float32),
        b2=s * jax.random.normal(ks[5], (cout,), jnp.float32),
        g2=1.0 + 0.1 * jax.random.normal(ks[6], (cout,), jnp.float32),
        be2=0.1 * jax.random.normal(ks[7], (cout,), jnp.float32),
        wbl=s * jax.random.normal(ks[8], (cout, cin, 1, 1), jnp.float32),
        bbl=s * jax.random.normal(ks[9], (cout,), jnp.float32),
        gbl=1.0 + 0.1 * jax.random.normal(ks[10], (cout,), jnp.float32),
        bebl=0.1 * jax.random.normal(ks[11], (cout,), jnp.float32),
    )


if __name__ == "__main__":
    key = jax.random.PRNGKey(0)
    k_x, k_bot, k_id = jax.random.split(key, 3)

    N, Cin, H, W = 2, 4, 16, 16
    Cout = 8
    x = jax.random.normal(k_x, (N, Cin, H, W), jnp.float32)

    # bf16 matmul inputs (f32 accumulation / BN math) vs. the all-f32 reference:
    # widen the pointwise tolerance accordingly but also check the mean error.
    ATOL = RTOL = 5e-2
    MEAN_TOL = 2e-2

    # --- bot_layer=True: 4 -> 8 channels, spatial 16 -> 8 (all three convs) ---
    p_bot = init_params(Cin, Cout, k_bot)
    y_bot = jax.block_until_ready(res_unit_forward(x, p_bot, bot_layer=True))
    y_bot_ref = res_unit_ref(x, p_bot, bot_layer=True)
    assert y_bot.shape == (N, Cout, H // 2, W // 2)
    assert bool(jnp.allclose(y_bot, y_bot_ref, atol=ATOL, rtol=RTOL))
    assert float(jnp.mean(jnp.abs(y_bot - y_bot_ref))) < MEAN_TOL

    # --- bot_layer=False: identity skip, channels/spatial preserved ---
    p_id = init_params(Cin, Cin, k_id)
    y_id = jax.block_until_ready(res_unit_forward(x, p_id, bot_layer=False))
    y_id_ref = res_unit_ref(x, p_id, bot_layer=False)
    assert y_id.shape == (N, Cin, H, W)
    assert bool(jnp.allclose(y_id, y_id_ref, atol=ATOL, rtol=RTOL))
    assert float(jnp.mean(jnp.abs(y_id - y_id_ref))) < MEAN_TOL

    print("KERNEL_OK")
</pallas_src>

<mosaic_0001>
module attributes {stable_mosaic.version = 11 : i64} {
  func.func @bn_relu_kernel(%arg0: i32, %arg1: memref<128x128xf32, #tpu.memory_space<vmem>>, %arg2: memref<1x128xf32, #tpu.memory_space<vmem>>, %arg3: memref<1x128xf32, #tpu.memory_space<vmem>>, %arg4: memref<128x128xbf16, #tpu.memory_space<vmem>>) attributes {dimension_semantics = [#tpu.dimension_semantics<parallel>], iteration_bounds = array<i64: 1>, scalar_prefetch = 0 : i64, scratch_operands = 0 : i64, tpu.core_type = #tpu.core_type<tc>, window_params = [{transform_indices = @transform_0, window_bounds = array<i64: 128, 128>}, {pipeline_mode = #tpu.pipeline_mode<synchronous>, transform_indices = @transform_1, window_bounds = array<i64: 1, 128>}, {pipeline_mode = #tpu.pipeline_mode<synchronous>, transform_indices = @transform_2, window_bounds = array<i64: 1, 128>}, {transform_indices = @transform_3, window_bounds = array<i64: 128, 128>}]} {
    %c0 = arith.constant 0 : index
    %c0_0 = arith.constant 0 : index
    %0 = vector.load %arg1[%c0, %c0_0] : memref<128x128xf32, #tpu.memory_space<vmem>>, vector<128x128xf32>
    %c0_1 = arith.constant 0 : index
    %c0_2 = arith.constant 0 : index
    %1 = vector.load %arg2[%c0_1, %c0_2] : memref<1x128xf32, #tpu.memory_space<vmem>>, vector<1x128xf32>
    %2 = vector.broadcast %1 : vector<1x128xf32> to vector<128x128xf32>
    %3 = arith.mulf %0, %2 : vector<128x128xf32>
    %c0_3 = arith.constant 0 : index
    %c0_4 = arith.constant 0 : index
    %4 = vector.load %arg3[%c0_3, %c0_4] : memref<1x128xf32, #tpu.memory_space<vmem>>, vector<1x128xf32>
    %5 = vector.broadcast %4 : vector<1x128xf32> to vector<128x128xf32>
    %6 = arith.addf %3, %5 : vector<128x128xf32>
    %cst = arith.constant 0.000000e+00 : f32
    %7 = vector.broadcast %cst : f32 to vector<128x128xf32>
    %8 = arith.maximumf %6, %7 : vector<128x128xf32>
    %9 = arith.truncf %8 : vector<128x128xf32> to vector<128x128xbf16>
    %c0_5 = arith.constant 0 : index
    %c0_6 = arith.constant 0 : index
    %10 = vector.load %arg4[%c0_5, %c0_6] : memref<128x128xbf16, #tpu.memory_space<vmem>>, vector<128x128xbf16>
    tpu.vector_store %arg4[%c0_5, %c0_6], %9 {strides = array<i32>} : memref<128x128xbf16, #tpu.memory_space<vmem>>, vector<128x128xbf16>,
    return
  }
  func.func @transform_0(%arg0: i32) -> (i32, i32) {
    %c0_i32 = arith.constant 0 : i32
    %c0_i32_0 = arith.constant 0 : i32
    return %arg0, %c0_i32 : i32, i32
  }
  func.func @transform_1(%arg0: i32) -> (i32, i32) {
    %c0_i32 = arith.constant 0 : i32
    %c0_i32_0 = arith.constant 0 : i32
    %c0_i32_1 = arith.constant 0 : i32
    return %c0_i32, %c0_i32_0 : i32, i32
  }
  func.func @transform_2(%arg0: i32) -> (i32, i32) {
    %c0_i32 = arith.constant 0 : i32
    %c0_i32_0 = arith.constant 0 : i32
    %c0_i32_1 = arith.constant 0 : i32
    return %c0_i32, %c0_i32_0 : i32, i32
  }
  func.func @transform_3(%arg0: i32) -> (i32, i32) {
    %c0_i32 = arith.constant 0 : i32
    %c0_i32_0 = arith.constant 0 : i32
    return %arg0, %c0_i32 : i32, i32
  }
}

module attributes {stable_mosaic.version = 11 : i64} {
  func.func @conv_stats_kernel(%arg0: i32, %arg1: memref<128x36xbf16, #tpu.memory_space<vmem>>, %arg2: memref<36x128xbf16, #tpu.memory_space<vmem>>, %arg3: memref<128x128xf32, #tpu.memory_space<vmem>>, %arg4: memref<1x2x128xf32, #tpu.memory_space<vmem>>) attributes {dimension_semantics = [#tpu.dimension_semantics<parallel>], iteration_bounds = array<i64: 1>, scalar_prefetch = 0 : i64, scratch_operands = 0 : i64, tpu.core_type = #tpu.core_type<tc>, window_params = [{transform_indices = @transform_0, window_bounds = array<i64: 128, 36>}, {pipeline_mode = #tpu.pipeline_mode<synchronous>, transform_indices = @transform_1, window_bounds = array<i64: 36, 128>}, {transform_indices = @transform_2, window_bounds = array<i64: 128, 128>}, {transform_indices = @transform_3, window_bounds = array<i64: 1, 2, 128>}]} {
    %c0 = arith.constant 0 : index
    %c0_0 = arith.constant 0 : index
    %0 = vector.load %arg1[%c0, %c0_0] : memref<128x36xbf16, #tpu.memory_space<vmem>>, vector<128x36xbf16>
    %c0_1 = arith.constant 0 : index
    %c0_2 = arith.constant 0 : index
    %1 = vector.load %arg2[%c0_1, %c0_2] : memref<36x128xbf16, #tpu.memory_space<vmem>>, vector<36x128xbf16>
    %cst = arith.constant dense<0.000000e+00> : vector<128x128xf32>
    %2 = tpu.matmul %0, %1, %cst {dimension_numbers = #tpu.dot_dimension_numbers<[1], [0], [0], [1], [0, 0, 1, 1], [], []>} : vector<128x36xbf16>, vector<36x128xbf16>, vector<128x128xf32> -> vector<128x128xf32>
    %c0_3 = arith.constant 0 : index
    %c0_4 = arith.constant 0 : index
    %3 = vector.load %arg3[%c0_3, %c0_4] : memref<128x128xf32, #tpu.memory_space<vmem>>, vector<128x128xf32>
    tpu.vector_store %arg3[%c0_3, %c0_4], %2 {strides = array<i32>} : memref<128x128xf32, #tpu.memory_space<vmem>>, vector<128x128xf32>,
    %cst_5 = arith.constant dense<0.000000e+00> : vector<128xf32>
    %4 = vector.multi_reduction <add>, %2, %cst_5 [0] : vector<128x128xf32> to vector<128xf32>
    %5 = vector.shape_cast %4 : vector<128xf32> to vector<1x128xf32>
    %6 = arith.mulf %2, %2 : vector<128x128xf32>
    %cst_6 = arith.constant dense<0.000000e+00> : vector<128xf32>
    %7 = vector.multi_reduction <add>, %6, %cst_6 [0] : vector<128x128xf32> to vector<128xf32>
    %8 = vector.shape_cast %7 : vector<128xf32> to vector<1x128xf32>
    %9 = tpu.concatenate %5, %8 in 0 : vector<1x128xf32>, vector<1x128xf32> -> vector<2x128xf32>
    %c0_7 = arith.constant 0 : index
    %c0_8 = arith.constant 0 : index
    %c0_9 = arith.constant 0 : index
    %10 = vector.load %arg4[%c0_7, %c0_8, %c0_9] : memref<1x2x128xf32, #tpu.memory_space<vmem>>, vector<1x2x128xf32>
    %11 = vector.shape_cast %10 : vector<1x2x128xf32> to vector<2x128xf32>
    %12 = vector.shape_cast %9 : vector<2x128xf32> to vector<1x2x128xf32>
    tpu.vector_store %arg4[%c0_7, %c0_8, %c0_9], %12 {strides = array<i32>} : memref<1x2x128xf32, #tpu.memory_space<vmem>>, vector<1x2x128xf32>,
    return
  }
  func.func @transform_0(%arg0: i32) -> (i32, i32) {
    %c0_i32 = arith.constant 0 : i32
    %c0_i32_0 = arith.constant 0 : i32
    return %arg0, %c0_i32 : i32, i32
  }
  func.func @transform_1(%arg0: i32) -> (i32, i32) {
    %c0_i32 = arith.constant 0 : i32
    %c0_i32_0 = arith.constant 0 : i32
    %c0_i32_1 = arith.constant 0 : i32
    return %c0_i32, %c0_i32_0 : i32, i32
  }
  func.func @transform_2(%arg0: i32) -> (i32, i32) {
    %c0_i32 = arith.constant 0 : i32
    %c0_i32_0 = arith.constant 0 : i32
    return %arg0, %c0_i32 : i32, i32
  }
  func.func @transform_3(%arg0: i32) -> (i32, i32, i32) {
    %c0_i32 = arith.constant 0 : i32
    %c0_i32_0 = arith.constant 0 : i32
    %c0_i32_1 = arith.constant 0 : i32
    return %arg0, %c0_i32, %c0_i32_0 : i32, i32, i32
  }
}

module attributes {stable_mosaic.version = 11 : i64} {
  func.func @bn2_bnbl_add_relu_kernel(%arg0: i32, %arg1: memref<128x128xf32, #tpu.memory_space<vmem>>, %arg2: memref<128x128xf32, #tpu.memory_space<vmem>>, %arg3: memref<1x128xf32, #tpu.memory_space<vmem>>, %arg4: memref<1x128xf32, #tpu.memory_space<vmem>>, %arg5: memref<1x128xf32, #tpu.memory_space<vmem>>, %arg6: memref<1x128xf32, #tpu.memory_space<vmem>>, %arg7: memref<128x128xf32, #tpu.memory_space<vmem>>) attributes {dimension_semantics = [#tpu.dimension_semantics<parallel>], iteration_bounds = array<i64: 1>, scalar_prefetch = 0 : i64, scratch_operands = 0 : i64, tpu.core_type = #tpu.core_type<tc>, window_params = [{transform_indices = @transform_0, window_bounds = array<i64: 128, 128>}, {transform_indices = @transform_1, window_bounds = array<i64: 128, 128>}, {pipeline_mode = #tpu.pipeline_mode<synchronous>, transform_indices = @transform_2, window_bounds = array<i64: 1, 128>}, {pipeline_mode = #tpu.pipeline_mode<synchronous>, transform_indices = @transform_3, window_bounds = array<i64: 1, 128>}, {pipeline_mode = #tpu.pipeline_mode<synchronous>, transform_indices = @transform_4, window_bounds = array<i64: 1, 128>}, {pipeline_mode = #tpu.pipeline_mode<synchronous>, transform_indices = @transform_5, window_bounds = array<i64: 1, 128>}, {transform_indices = @transform_6, window_bounds = array<i64: 128, 128>}]} {
    %c0 = arith.constant 0 : index
    %c0_0 = arith.constant 0 : index
    %0 = vector.load %arg1[%c0, %c0_0] : memref<128x128xf32, #tpu.memory_space<vmem>>, vector<128x128xf32>
    %c0_1 = arith.constant 0 : index
    %c0_2 = arith.constant 0 : index
    %1 = vector.load %arg3[%c0_1, %c0_2] : memref<1x128xf32, #tpu.memory_space<vmem>>, vector<1x128xf32>
    %2 = vector.broadcast %1 : vector<1x128xf32> to vector<128x128xf32>
    %3 = arith.mulf %0, %2 : vector<128x128xf32>
    %c0_3 = arith.constant 0 : index
    %c0_4 = arith.constant 0 : index
    %4 = vector.load %arg4[%c0_3, %c0_4] : memref<1x128xf32, #tpu.memory_space<vmem>>, vector<1x128xf32>
    %5 = vector.broadcast %4 : vector<1x128xf32> to vector<128x128xf32>
    %6 = arith.addf %3, %5 : vector<128x128xf32>
    %c0_5 = arith.constant 0 : index
    %c0_6 = arith.constant 0 : index
    %7 = vector.load %arg2[%c0_5, %c0_6] : memref<128x128xf32, #tpu.memory_space<vmem>>, vector<128x128xf32>
    %c0_7 = arith.constant 0 : index
    %c0_8 = arith.constant 0 : index
    %8 = vector.load %arg5[%c0_7, %c0_8] : memref<1x128xf32, #tpu.memory_space<vmem>>, vector<1x128xf32>
    %9 = vector.broadcast %8 : vector<1x128xf32> to vector<128x128xf32>
    %10 = arith.mulf %7, %9 : vector<128x128xf32>
    %11 = arith.addf %6, %10 : vector<128x128xf32>
    %c0_9 = arith.constant 0 : index
    %c0_10 = arith.constant 0 : index
    %12 = vector.load %arg6[%c0_9, %c0_10] : memref<1x128xf32, #tpu.memory_space<vmem>>, vector<1x128xf32>
    %13 = vector.broadcast %12 : vector<1x128xf32> to vector<128x128xf32>
    %14 = arith.addf %11, %13 : vector<128x128xf32>
    %cst = arith.constant 0.000000e+00 : f32
    %15 = vector.broadcast %cst : f32 to vector<128x128xf32>
    %16 = arith.maximumf %14, %15 : vector<128x128xf32>
    %c0_11 = arith.constant 0 : index
    %c0_12 = arith.constant 0 : index
    %17 = vector.load %arg7[%c0_11, %c0_12] : memref<128x128xf32, #tpu.memory_space<vmem>>, vector<128x128xf32>
    tpu.vector_store %arg7[%c0_11, %c0_12], %16 {strides = array<i32>} : memref<128x128xf32, #tpu.memory_space<vmem>>, vector<128x128xf32>,
    return
  }
  func.func @transform_0(%arg0: i32) -> (i32, i32) {
    %c0_i32 = arith.constant 0 : i32
    %c0_i32_0 = arith.constant 0 : i32
    return %arg0, %c0_i32 : i32, i32
  }
  func.func @transform_1(%arg0: i32) -> (i32, i32) {
    %c0_i32 = arith.constant 0 : i32
    %c0_i32_0 = arith.constant 0 : i32
    return %arg0, %c0_i32 : i32, i32
  }
  func.func @transform_2(%arg0: i32) -> (i32, i32) {
    %c0_i32 = arith.constant 0 : i32
    %c0_i32_0 = arith.constant 0 : i32
    %c0_i32_1 = arith.constant 0 : i32
    return %c0_i32, %c0_i32_0 : i32, i32
  }
  func.func @transform_3(%arg0: i32) -> (i32, i32) {
    %c0_i32 = arith.constant 0 : i32
    %c0_i32_0 = arith.constant 0 : i32
    %c0_i32_1 = arith.constant 0 : i32
    return %c0_i32, %c0_i32_0 : i32, i32
  }
  func.func @transform_4(%arg0: i32) -> (i32, i32) {
    %c0_i32 = arith.constant 0 : i32
    %c0_i32_0 = arith.constant 0 : i32
    %c0_i32_1 = arith.constant 0 : i32
    return %c0_i32, %c0_i32_0 : i32, i32
  }
  func.func @transform_5(%arg0: i32) -> (i32, i32) {
    %c0_i32 = arith.constant 0 : i32
    %c0_i32_0 = arith.constant 0 : i32
    %c0_i32_1 = arith.constant 0 : i32
    return %c0_i32, %c0_i32_0 : i32, i32
  }
  func.func @transform_6(%arg0: i32) -> (i32, i32) {
    %c0_i32 = arith.constant 0 : i32
    %c0_i32_0 = arith.constant 0 : i32
    return %arg0, %c0_i32 : i32, i32
  }
}

module attributes {stable_mosaic.version = 11 : i64} {
  func.func @conv_pair_stats_kernel(%arg0: i32, %arg1: memref<128x72xbf16, #tpu.memory_space<vmem>>, %arg2: memref<72x128xbf16, #tpu.memory_space<vmem>>, %arg3: memref<128x4xbf16, #tpu.memory_space<vmem>>, %arg4: memref<4x128xbf16, #tpu.memory_space<vmem>>, %arg5: memref<128x128xf32, #tpu.memory_space<vmem>>, %arg6: memref<128x128xf32, #tpu.memory_space<vmem>>, %arg7: memref<1x2x128xf32, #tpu.memory_space<vmem>>, %arg8: memref<1x2x128xf32, #tpu.memory_space<vmem>>) attributes {dimension_semantics = [#tpu.dimension_semantics<parallel>], iteration_bounds = array<i64: 1>, scalar_prefetch = 0 : i64, scratch_operands = 0 : i64, tpu.core_type = #tpu.core_type<tc>, window_params = [{transform_indices = @transform_0, window_bounds = array<i64: 128, 72>}, {pipeline_mode = #tpu.pipeline_mode<synchronous>, transform_indices = @transform_1, window_bounds = array<i64: 72, 128>}, {transform_indices = @transform_2, window_bounds = array<i64: 128, 4>}, {pipeline_mode = #tpu.pipeline_mode<synchronous>, transform_indices = @transform_3, window_bounds = array<i64: 4, 128>}, {transform_indices = @transform_4, window_bounds = array<i64: 128, 128>}, {transform_indices = @transform_5, window_bounds = array<i64: 128, 128>}, {transform_indices = @transform_6, window_bounds = array<i64: 1, 2, 128>}, {transform_indices = @transform_7, window_bounds = array<i64: 1, 2, 128>}]} {
    %c0 = arith.constant 0 : index
    %c0_0 = arith.constant 0 : index
    %0 = vector.load %arg1[%c0, %c0_0] : memref<128x72xbf16, #tpu.memory_space<vmem>>, vector<128x72xbf16>
    %c0_1 = arith.constant 0 : index
    %c0_2 = arith.constant 0 : index
    %1 = vector.load %arg2[%c0_1, %c0_2] : memref<72x128xbf16, #tpu.memory_space<vmem>>, vector<72x128xbf16>
    %cst = arith.constant dense<0.000000e+00> : vector<128x128xf32>
    %2 = tpu.matmul %0, %1, %cst {dimension_numbers = #tpu.dot_dimension_numbers<[1], [0], [0], [1], [0, 0, 1, 1], [], []>} : vector<128x72xbf16>, vector<72x128xbf16>, vector<128x128xf32> -> vector<128x128xf32>
    %c0_3 = arith.constant 0 : index
    %c0_4 = arith.constant 0 : index
    %3 = vector.load %arg3[%c0_3, %c0_4] : memref<128x4xbf16, #tpu.memory_space<vmem>>, vector<128x4xbf16>
    %c0_5 = arith.constant 0 : index
    %c0_6 = arith.constant 0 : index
    %4 = vector.load %arg4[%c0_5, %c0_6] : memref<4x128xbf16, #tpu.memory_space<vmem>>, vector<4x128xbf16>
    %cst_7 = arith.constant dense<0.000000e+00> : vector<128x128xf32>
    %5 = tpu.matmul %3, %4, %cst_7 {dimension_numbers = #tpu.dot_dimension_numbers<[1], [0], [0], [1], [0, 0, 1, 1], [], []>} : vector<128x4xbf16>, vector<4x128xbf16>, vector<128x128xf32> -> vector<128x128xf32>
    %c0_8 = arith.constant 0 : index
    %c0_9 = arith.constant 0 : index
    %6 = vector.load %arg5[%c0_8, %c0_9] : memref<128x128xf32, #tpu.memory_space<vmem>>, vector<128x128xf32>
    tpu.vector_store %arg5[%c0_8, %c0_9], %2 {strides = array<i32>} : memref<128x128xf32, #tpu.memory_space<vmem>>, vector<128x128xf32>,
    %c0_10 = arith.constant 0 : index
    %c0_11 = arith.constant 0 : index
    %7 = vector.load %arg6[%c0_10, %c0_11] : memref<128x128xf32, #tpu.memory_space<vmem>>, vector<128x128xf32>
    tpu.vector_store %arg6[%c0_10, %c0_11], %5 {strides = array<i32>} : memref<128x128xf32, #tpu.memory_space<vmem>>, vector<128x128xf32>,
    %cst_12 = arith.constant dense<0.000000e+00> : vector<128xf32>
    %8 = vector.multi_reduction <add>, %2, %cst_12 [0] : vector<128x128xf32> to vector<128xf32>
    %9 = vector.shape_cast %8 : vector<128xf32> to vector<1x128xf32>
    %10 = arith.mulf %2, %2 : vector<128x128xf32>
    %cst_13 = arith.constant dense<0.000000e+00> : vector<128xf32>
    %11 = vector.multi_reduction <add>, %10, %cst_13 [0] : vector<128x128xf32> to vector<128xf32>
    %12 = vector.shape_cast %11 : vector<128xf32> to vector<1x128xf32>
    %13 = tpu.concatenate %9, %12 in 0 : vector<1x128xf32>, vector<1x128xf32> -> vector<2x128xf32>
    %c0_14 = arith.constant 0 : index
    %c0_15 = arith.constant 0 : index
    %c0_16 = arith.constant 0 : index
    %14 = vector.load %arg7[%c0_14, %c0_15, %c0_16] : memref<1x2x128xf32, #tpu.memory_space<vmem>>, vector<1x2x128xf32>
    %15 = vector.shape_cast %14 : vector<1x2x128xf32> to vector<2x128xf32>
    %16 = vector.shape_cast %13 : vector<2x128xf32> to vector<1x2x128xf32>
    tpu.vector_store %arg7[%c0_14, %c0_15, %c0_16], %16 {strides = array<i32>} : memref<1x2x128xf32, #tpu.memory_space<vmem>>, vector<1x2x128xf32>,
    %cst_17 = arith.constant dense<0.000000e+00> : vector<128xf32>
    %17 = vector.multi_reduction <add>, %5, %cst_17 [0] : vector<128x128xf32> to vector<128xf32>
    %18 = vector.shape_cast %17 : vector<128xf32> to vector<1x128xf32>
    %19 = arith.mulf %5, %5 : vector<128x128xf32>
    %cst_18 = arith.constant dense<0.000000e+00> : vector<128xf32>
    %20 = vector.multi_reduction <add>, %19, %cst_18 [0] : vector<128x128xf32> to vector<128xf32>
    %21 = vector.shape_cast %20 : vector<128xf32> to vector<1x128xf32>
    %22 = tpu.concatenate %18, %21 in 0 : vector<1x128xf32>, vector<1x128xf32> -> vector<2x128xf32>
    %c0_19 = arith.constant 0 : index
    %c0_20 = arith.constant 0 : index
    %c0_21 = arith.constant 0 : index
    %23 = vector.load %arg8[%c0_19, %c0_20, %c0_21] : memref<1x2x128xf32, #tpu.memory_space<vmem>>, vector<1x2x128xf32>
    %24 = vector.shape_cast %23 : vector<1x2x128xf32> to vector<2x128xf32>
    %25 = vector.shape_cast %22 : vector<2x128xf32> to vector<1x2x128xf32>
    tpu.vector_store %arg8[%c0_19, %c0_20, %c0_21], %25 {strides = array<i32>} : memref<1x2x128xf32, #tpu.memory_space<vmem>>, vector<1x2x128xf32>,
    return
  }
  func.func @transform_0(%arg0: i32) -> (i32, i32) {
    %c0_i32 = arith.constant 0 : i32
    %c0_i32_0 = arith.constant 0 : i32
    return %arg0, %c0_i32 : i32, i32
  }
  func.func @transform_1(%arg0: i32) -> (i32, i32) {
    %c0_i32 = arith.constant 0 : i32
    %c0_i32_0 = arith.constant 0 : i32
    %c0_i32_1 = arith.constant 0 : i32
    return %c0_i32, %c0_i32_0 : i32, i32
  }
  func.func @transform_2(%arg0: i32) -> (i32, i32) {
    %c0_i32 = arith.constant 0 : i32
    %c0_i32_0 = arith.constant 0 : i32
    return %arg0, %c0_i32 : i32, i32
  }
  func.func @transform_3(%arg0: i32) -> (i32, i32) {
    %c0_i32 = arith.constant 0 : i32
    %c0_i32_0 = arith.constant 0 : i32
    %c0_i32_1 = arith.constant 0 : i32
    return %c0_i32, %c0_i32_0 : i32, i32
  }
  func.func @transform_4(%arg0: i32) -> (i32, i32) {
    %c0_i32 = arith.constant 0 : i32
    %c0_i32_0 = arith.constant 0 : i32
    return %arg0, %c0_i32 : i32, i32
  }
  func.func @transform_5(%arg0: i32) -> (i32, i32) {
    %c0_i32 = arith.constant 0 : i32
    %c0_i32_0 = arith.constant 0 : i32
    return %arg0, %c0_i32 : i32, i32
  }
  func.func @transform_6(%arg0: i32) -> (i32, i32, i32) {
    %c0_i32 = arith.constant 0 : i32
    %c0_i32_0 = arith.constant 0 : i32
    %c0_i32_1 = arith.constant 0 : i32
    return %arg0, %c0_i32, %c0_i32_0 : i32, i32, i32
  }
  func.func @transform_7(%arg0: i32) -> (i32, i32, i32) {
    %c0_i32 = arith.constant 0 : i32
    %c0_i32_0 = arith.constant 0 : i32
    %c0_i32_1 = arith.constant 0 : i32
    return %arg0, %c0_i32, %c0_i32_0 : i32, i32, i32
  }
}

</mosaic_0001>

<llo_original>
// kernel: res_unit_forward.5
$region0: #{res_unit_forward.5}
  #allocation0 [shape = 'u32[]', space=smem, size = 0x4, offset = 0x4, fixed_abs, tag = 'smem constant byte address 0x4 - core index']
  #allocation1 [shape = 'u32[144,128]{1,0:T(1,128)}', space=vmem, size = 0x12000, scoped, tag = 'internal scratch']
  %s0 = inlined_call_operand.vmem [shape: f32[128,128], index: 0, kind: input, shape index: {}]
  %s1 = inlined_call_operand.vmem [shape: f32[1,128], index: 1, kind: input, shape index: {}]
  %s2 = inlined_call_operand.vmem [shape: f32[1,128], index: 2, kind: input, shape index: {}]
  %s3 = inlined_call_operand.vmem [shape: bf16[128,128], index: 3, kind: output, shape index: {}]
  %s4 = sld [smem:[#allocation0]]
  $region22: #{res_unit_forward.5} parent=0
    _
  %s6 = ssub.s32 1, %s4
  %s7 = scalar_select 0, %s6, %s4
  // Predicated region
  $region2: #{res_unit_forward.5} parent=0 // pred_check
    _
  $region3: #{res_unit_forward.5} parent=0 // pred_check_branch
    %9 = sbr.rel (0) target = $region5
  $region4: #{res_unit_forward.5} parent=0 // pred_region
    _
  $region5: #{res_unit_forward.5} parent=0 // pred_fallthru
    _
  // Predicated region
  $region6: #{res_unit_forward.5} parent=0 // pred_check
    _
  $region7: #{res_unit_forward.5} parent=0 // pred_check_branch
    %11 = sbr.rel (0) target = $region9
  $region8: #{res_unit_forward.5} parent=0 // pred_region
    _
  $region9: #{res_unit_forward.5} parent=0 // pred_fallthru
    _
  // Predicated region
  $region10: #{res_unit_forward.5} parent=0 // pred_check
    _
  $region11: #{res_unit_forward.5} parent=0 // pred_check_branch
    %13 = sbr.rel (0) target = $region13
  $region12: #{res_unit_forward.5} parent=0 // pred_region
    _
  $region13: #{res_unit_forward.5} parent=0 // pred_fallthru
    _
  %v14 = vld [vmem:[%s0] sm:$0xff]
  %v15 = vld [vmem:[%s0 + $0x8] sm:$0xff]
  %v16 = vld [vmem:[%s0 + $0x10] sm:$0xff]
  %v17 = vld [vmem:[%s0 + $0x18] sm:$0xff]
  %v18 = vld [vmem:[%s0 + $0x20] sm:$0xff]
  %v19 = vld [vmem:[%s0 + $0x28] sm:$0xff]
  %v20 = vld [vmem:[%s0 + $0x30] sm:$0xff]
  %v21 = vld [vmem:[%s0 + $0x38] sm:$0xff]
  %v22 = vld [vmem:[%s0 + $0x40] sm:$0xff]
  %v23 = vld [vmem:[%s0 + $0x48] sm:$0xff]
  %v24 = vld [vmem:[%s0 + $0x50] sm:$0xff]
  %v25 = vld [vmem:[%s0 + $0x58] sm:$0xff]
  %v26 = vld [vmem:[%s0 + $0x60] sm:$0xff]
  %v27 = vld [vmem:[%s0 + $0x68] sm:$0xff]
  %v28 = vld [vmem:[%s0 + $0x70] sm:$0xff]
  %v29 = vld [vmem:[%s0 + $0x78] sm:$0xff]
  %v30 = vld [vmem:[%s1] sm:$0x1]
  %v32 = vlaneseq
  %v33 = vshrl.u32 %v32, 7
  %v34 = vsub.s32 0, %v33
  %v35 = vrot.slane %v30, %v34
  %v37 = vmul.f32 %v14, %v35
  %v38 = vmul.f32 %v15, %v35
  %v39 = vmul.f32 %v16, %v35
  %v40 = vmul.f32 %v17, %v35
  %v41 = vmul.f32 %v18, %v35
  %v42 = vmul.f32 %v19, %v35
  %v43 = vmul.f32 %v20, %v35
  %v44 = vmul.f32 %v21, %v35
  %v45 = vmul.f32 %v22, %v35
  %v46 = vmul.f32 %v23, %v35
  %v47 = vmul.f32 %v24, %v35
  %v48 = vmul.f32 %v25, %v35
  %v49 = vmul.f32 %v26, %v35
  %v50 = vmul.f32 %v27, %v35
  %v51 = vmul.f32 %v28, %v35
  %v52 = vmul.f32 %v29, %v35
  %v53 = vld [vmem:[%s2] sm:$0x1]
  %v55 = vlaneseq
  %v56 = vshrl.u32 %v55, 7
  %v57 = vsub.s32 0, %v56
  %v58 = vrot.slane %v53, %v57
  %v60 = vadd.f32 %v37, %v58
  %v61 = vadd.f32 %v38, %v58
  %v62 = vadd.f32 %v39, %v58
  %v63 = vadd.f32 %v40, %v58
  %v64 = vadd.f32 %v41, %v58
  %v65 = vadd.f32 %v42, %v58
  %v66 = vadd.f32 %v43, %v58
  %v67 = vadd.f32 %v44, %v58
  %v68 = vadd.f32 %v45, %v58
  %v69 = vadd.f32 %v46, %v58
  %v70 = vadd.f32 %v47, %v58
  %v71 = vadd.f32 %v48, %v58
  %v72 = vadd.f32 %v49, %v58
  %v73 = vadd.f32 %v50, %v58
  %v74 = vadd.f32 %v51, %v58
  %v75 = vadd.f32 %v52, %v58
  %v76 = vmax.f32 %v60, 0.0
  %v77 = vmax.f32 %v61, 0.0
  %v78 = vmax.f32 %v62, 0.0
  %v79 = vmax.f32 %v63, 0.0
  %v80 = vmax.f32 %v64, 0.0
  %v81 = vmax.f32 %v65, 0.0
  %v82 = vmax.f32 %v66, 0.0
  %v83 = vmax.f32 %v67, 0.0
  %v84 = vmax.f32 %v68, 0.0
  %v85 = vmax.f32 %v69, 0.0
  %v86 = vmax.f32 %v70, 0.0
  %v87 = vmax.f32 %v71, 0.0
  %v88 = vmax.f32 %v72, 0.0
  %v89 = vmax.f32 %v73, 0.0
  %v90 = vmax.f32 %v74, 0.0
  %v91 = vmax.f32 %v75, 0.0
  %v92 = vpack.c.bf16 %v77, %v76
  %v93 = vpack.c.bf16 %v79, %v78
  %v94 = vpack.c.bf16 %v81, %v80
  %v95 = vpack.c.bf16 %v83, %v82
  %v96 = vpack.c.bf16 %v85, %v84
  %v97 = vpack.c.bf16 %v87, %v86
  %v98 = vpack.c.bf16 %v89, %v88
  %v99 = vpack.c.bf16 %v91, %v90
  %v108 = vunpack.c.l.b16 %v92
  %v109 = vunpack.c.h.b16 %v92
  %v110 = vunpack.c.l.b16 %v93
  %v111 = vunpack.c.h.b16 %v93
  %v112 = vunpack.c.l.b16 %v94
  %v113 = vunpack.c.h.b16 %v94
  %v114 = vunpack.c.l.b16 %v95
  %v115 = vunpack.c.h.b16 %v95
  %v116 = vunpack.c.l.b16 %v96
  %v117 = vunpack.c.h.b16 %v96
  %v118 = vunpack.c.l.b16 %v97
  %v119 = vunpack.c.h.b16 %v97
  %v120 = vunpack.c.l.b16 %v98
  %v121 = vunpack.c.h.b16 %v98
  %v122 = vunpack.c.l.b16 %v99
  %v123 = vunpack.c.h.b16 %v99
  %v124 = vpack.c.b16 %v108, %v108
  %v125 = vpack.c.b16 %v109, %v109
  %v126 = vpack.c.b16 %v110, %v110
  %v127 = vpack.c.b16 %v111, %v111
  %v128 = vpack.c.b16 %v112, %v112
  %v129 = vpack.c.b16 %v113, %v113
  %v130 = vpack.c.b16 %v114, %v114
  %v131 = vpack.c.b16 %v115, %v115
  %v132 = vpack.c.b16 %v116, %v116
  %v133 = vpack.c.b16 %v117, %v117
  %v134 = vpack.c.b16 %v118, %v118
  %v135 = vpack.c.b16 %v119, %v119
  %v136 = vpack.c.b16 %v120, %v120
  %v137 = vpack.c.b16 %v121, %v121
  %v138 = vpack.c.b16 %v122, %v122
  %v139 = vpack.c.b16 %v123, %v123
  %156 = vst [vmem:[%s3] sm:$0xf] %v124
  %157 = vst [vmem:[%s3 + $0x4] sm:$0xf] %v125
  %158 = vst [vmem:[%s3 + $0x8] sm:$0xf] %v126
  %159 = vst [vmem:[%s3 + $0xc] sm:$0xf] %v127
  %160 = vst [vmem:[%s3 + $0x10] sm:$0xf] %v128
  %161 = vst [vmem:[%s3 + $0x14] sm:$0xf] %v129
  %162 = vst [vmem:[%s3 + $0x18] sm:$0xf] %v130
  %163 = vst [vmem:[%s3 + $0x1c] sm:$0xf] %v131
  %164 = vst [vmem:[%s3 + $0x20] sm:$0xf] %v132
  %165 = vst [vmem:[%s3 + $0x24] sm:$0xf] %v133
  %166 = vst [vmem:[%s3 + $0x28] sm:$0xf] %v134
  %167 = vst [vmem:[%s3 + $0x2c] sm:$0xf] %v135
  %168 = vst [vmem:[%s3 + $0x30] sm:$0xf] %v136
  %169 = vst [vmem:[%s3 + $0x34] sm:$0xf] %v137
  %170 = vst [vmem:[%s3 + $0x38] sm:$0xf] %v138
  %171 = vst [vmem:[%s3 + $0x3c] sm:$0xf] %v139
  // Predicated region
  $region14: #{res_unit_forward.5} parent=0 // pred_check
    _
  $region15: #{res_unit_forward.5} parent=0 // pred_check_branch
    %173 = sbr.rel (0) target = $region17
  $region16: #{res_unit_forward.5} parent=0 // pred_region
    _
  $region17: #{res_unit_forward.5} parent=0 // pred_fallthru
    _
  // Predicated region
  $region18: #{res_unit_forward.5} parent=0 // pred_check
    _
  $region19: #{res_unit_forward.5} parent=0 // pred_check_branch
    %175 = sbr.rel (0) target = $region21
  $region20: #{res_unit_forward.5} parent=0 // pred_region
    _
  $region21: #{res_unit_forward.5} parent=0 // pred_fallthru
    _

// kernel: res_unit_forward.4
$region0: #{res_unit_forward.4}
  #allocation0 [shape = 'u32[]', space=smem, size = 0x4, offset = 0x4, fixed_abs, tag = 'smem constant byte address 0x4 - core index']
  #allocation1 [shape = 'u32[144,128]{1,0:T(1,128)}', space=vmem, size = 0x12000, scoped, tag = 'internal scratch']
  %s0 = inlined_call_operand.vmem [shape: bf16[128,36], index: 0, kind: input, shape index: {}]
  %s1 = inlined_call_operand.vmem [shape: bf16[36,128], index: 1, kind: input, shape index: {}]
  %s2 = inlined_call_operand.vmem [shape: f32[128,128], index: 2, kind: output, shape index: {0}]
  %s3 = inlined_call_operand.vmem [shape: f32[1,2,128], index: 3, kind: output, shape index: {1}]
  %4 = xla_tuple %s2, %s3
  %s5 = sld [smem:[#allocation0]]
  $region26: #{res_unit_forward.4} parent=0
    _
  %s7 = ssub.s32 1, %s5
  %s8 = scalar_select 0, %s7, %s5
  // Predicated region
  $region2: #{res_unit_forward.4} parent=0 // pred_check
    _
  $region3: #{res_unit_forward.4} parent=0 // pred_check_branch
    %10 = sbr.rel (0) target = $region5
  $region4: #{res_unit_forward.4} parent=0 // pred_region
    _
  $region5: #{res_unit_forward.4} parent=0 // pred_fallthru
    _
  // Predicated region
  $region6: #{res_unit_forward.4} parent=0 // pred_check
    _
  $region7: #{res_unit_forward.4} parent=0 // pred_check_branch
    %12 = sbr.rel (0) target = $region9
  $region8: #{res_unit_forward.4} parent=0 // pred_region
    _
  $region9: #{res_unit_forward.4} parent=0 // pred_fallthru
    _
  %v14 = vld [vmem:[%s0] sm:$0xf]
  %v15 = vld [vmem:[%s0 + $0x4] sm:$0xf]
  %v16 = vld [vmem:[%s0 + $0x8] sm:$0xf]
  %v17 = vld [vmem:[%s0 + $0xc] sm:$0xf]
  %v18 = vld [vmem:[%s0 + $0x10] sm:$0xf]
  %v19 = vld [vmem:[%s0 + $0x14] sm:$0xf]
  %v20 = vld [vmem:[%s0 + $0x18] sm:$0xf]
  %v21 = vld [vmem:[%s0 + $0x1c] sm:$0xf]
  %v22 = vld [vmem:[%s0 + $0x20] sm:$0xf]
  %v23 = vld [vmem:[%s0 + $0x24] sm:$0xf]
  %v24 = vld [vmem:[%s0 + $0x28] sm:$0xf]
  %v25 = vld [vmem:[%s0 + $0x2c] sm:$0xf]
  %v26 = vld [vmem:[%s0 + $0x30] sm:$0xf]
  %v27 = vld [vmem:[%s0 + $0x34] sm:$0xf]
  %v28 = vld [vmem:[%s0 + $0x38] sm:$0xf]
  %v29 = vld [vmem:[%s0 + $0x3c] sm:$0xf]
  %v30 = vld [vmem:[%s1] sm:$0xf]
  %v31 = vld [vmem:[%s1 + $0x4] sm:$0xf]
  %v32 = vld [vmem:[%s1 + $0x8] sm:$0xf]
  %v33 = vld [vmem:[%s1 + $0xc] sm:$0xf]
  %v34 = vld [vmem:[%s1 + $0x10] sm:$0x3]
  %v51 = vunpack.c.l.b16 %v14
  %v52 = vunpack.c.l.b16 %v15
  %v53 = vunpack.c.l.b16 %v16
  %v54 = vunpack.c.l.b16 %v17
  %v55 = vunpack.c.l.b16 %v18
  %v56 = vunpack.c.l.b16 %v19
  %v57 = vunpack.c.l.b16 %v20
  %v58 = vunpack.c.l.b16 %v21
  %v59 = vunpack.c.l.b16 %v22
  %v60 = vunpack.c.l.b16 %v23
  %v61 = vunpack.c.l.b16 %v24
  %v62 = vunpack.c.l.b16 %v25
  %v63 = vunpack.c.l.b16 %v26
  %v64 = vunpack.c.l.b16 %v27
  %v65 = vunpack.c.l.b16 %v28
  %v66 = vunpack.c.l.b16 %v29
  %v67 = vpack.c.b16 %v52, %v51
  %v68 = vpack.c.b16 %v54, %v53
  %v69 = vpack.c.b16 %v56, %v55
  %v70 = vpack.c.b16 %v58, %v57
  %v71 = vpack.c.b16 %v60, %v59
  %v72 = vpack.c.b16 %v62, %v61
  %v73 = vpack.c.b16 %v64, %v63
  %v74 = vpack.c.b16 %v66, %v65
  %v80 = vunpack.c.l.b16 %v30
  %v81 = vunpack.c.l.b16 %v31
  %v82 = vunpack.c.l.b16 %v32
  %v83 = vunpack.c.l.b16 %v33
  %v84 = vunpack.c.l.b16 %v34
  %v85 = vpack.c.b16 %v81, %v80
  %v86 = vpack.c.b16 %v83, %v82
  %v87 = vpack.c.b16 %v84, %v84
  %vm90 = vcmask 293888
  %v92 = vsel %vm90, %v67, 0
  %v95 = vsel %vm90, %v68, 0
  %v98 = vsel %vm90, %v69, 0
  %v101 = vsel %vm90, %v70, 0
  %v104 = vsel %vm90, %v71, 0
  %v107 = vsel %vm90, %v72, 0
  %v110 = vsel %vm90, %v73, 0
  %v113 = vsel %vm90, %v74, 0
  %vm115 = vcmask 1041408
  %v117 = vsel %vm115, %v87, 0
  %119 = vmatprep.subr.bf16.mxu0 0
  %120 = vmatpush1.bf16.msra.mxu0 0
  %121 = vmatprep.subr.bf16.mxu0 0
  %122 = vmatpush1.bf16.msra.mxu0 0
  %123 = vmatprep.subr.bf16.mxu0 0
  %124 = vmatpush1.bf16.msra.mxu0 0
  %125 = vmatprep.subr.bf16.mxu0 0
  %126 = vmatpush1.bf16.msra.mxu0 0
  %127 = vmatprep.subr.bf16.mxu0 0
  %128 = vmatpush1.bf16.msra.mxu0 0
  %129 = vmatprep.subr.bf16.mxu0 0
  %130 = vmatpush1.bf16.msra.mxu0 %v117
  %131 = vmatprep.subr.bf16.mxu0 0
  %132 = vmatpush1.bf16.msra.mxu0 %v86
  %133 = vmatprep.subr.bf16.mxu0 0
  %134 = vmatpush1.bf16.msra.mxu0 %v85
  %135 = vmatprep.subr.bf16.mxu0 0
  %136 = vmatpush2.bf16.msra.mxu0 0
  %137 = vmatprep.subr.bf16.mxu0 0
  %138 = vmatpush2.bf16.msra.mxu0 0
  %139 = vmatprep.subr.bf16.mxu0 0
  %140 = vmatpush2.bf16.msra.mxu0 0
  %141 = vmatprep.subr.bf16.mxu0 0
  %142 = vmatpush2.bf16.msra.mxu0 0
  %143 = vmatprep.subr.bf16.mxu0 0
  %144 = vmatpush2.bf16.msra.mxu0 0
  %145 = vmatprep.subr.bf16.mxu0 0
  %146 = vmatpush2.bf16.msra.mxu0 0
  %147 = vmatprep.subr.bf16.mxu0 0
  %148 = vmatpush2.bf16.msra.mxu0 0
  %149 = vmatprep.subr.bf16.mxu0 0
  %150 = vmatpush2.bf16.msra.mxu0 0
  %151 = vmatprep.mubr.bf16.mxu0 0
  %152 = vmatmul.mubr.bf16.gmra.mxu0 %v92
  %v153 = vpop.f32.mrf.mxu0
  %v154 = vadd.f32 0.0, %v153
  %v155 = vpop.f32.mrf.mxu0
  %v156 = vpop.f32.mrf.mxu0
  %v157 = vadd.f32 0.0, %v156
  %v158 = vpop.f32.mrf.mxu0
  %159 = vmatprep.mubr.bf16.mxu0 0
  %160 = vmatmul.mubr.bf16.gmra.mxu0 %v95
  %v161 = vpop.f32.mrf.mxu0
  %v162 = vadd.f32 0.0, %v161
  %v163 = vpop.f32.mrf.mxu0
  %v164 = vpop.f32.mrf.mxu0
  %v165 = vadd.f32 0.0, %v164
  %v166 = vpop.f32.mrf.mxu0
  %167 = vmatprep.mubr.bf16.mxu0 0
  %168 = vmatmul.mubr.bf16.gmra.mxu0 %v98
  %v169 = vpop.f32.mrf.mxu0
  %v170 = vadd.f32 0.0, %v169
  %v171 = vpop.f32.mrf.mxu0
  %v172 = vpop.f32.mrf.mxu0
  %v173 = vadd.f32 0.0, %v172
  %v174 = vpop.f32.mrf.mxu0
  %175 = vmatprep.mubr.bf16.mxu0 0
  %176 = vmatmul.mubr.bf16.gmra.mxu0 %v101
  %v177 = vpop.f32.mrf.mxu0
  %v178 = vadd.f32 0.0, %v177
  %v179 = vpop.f32.mrf.mxu0
  %v180 = vpop.f32.mrf.mxu0
  %v181 = vadd.f32 0.0, %v180
  %v182 = vpop.f32.mrf.mxu0
  %183 = vmatprep.mubr.bf16.mxu0 0
  %184 = vmatmul.mubr.bf16.gmra.mxu0 %v104
  %v185 = vpop.f32.mrf.mxu0
  %v186 = vadd.f32 0.0, %v185
  %v187 = vpop.f32.mrf.mxu0
  %v188 = vpop.f32.mrf.mxu0
  %v189 = vadd.f32 0.0, %v188
  %v190 = vpop.f32.mrf.mxu0
  %191 = vmatprep.mubr.bf16.mxu0 0
  %192 = vmatmul.mubr.bf16.gmra.mxu0 %v107
  %v193 = vpop.f32.mrf.mxu0
  %v194 = vadd.f32 0.0, %v193
  %v195 = vpop.f32.mrf.mxu0
  %v196 = vpop.f32.mrf.mxu0
  %v197 = vadd.f32 0.0, %v196
  %v198 = vpop.f32.mrf.mxu0
  %199 = vmatprep.mubr.bf16.mxu0 0
  %200 = vmatmul.mubr.bf16.gmra.mxu0 %v110
  %v201 = vpop.f32.mrf.mxu0
  %v202 = vadd.f32 0.0, %v201
  %v203 = vpop.f32.mrf.mxu0
  %v204 = vpop.f32.mrf.mxu0
  %v205 = vadd.f32 0.0, %v204
  %v206 = vpop.f32.mrf.mxu0
  %207 = vmatprep.mubr.bf16.mxu0 0
  %208 = vmatmul.mubr.bf16.gmra.mxu0 %v113
  %v209 = vpop.f32.mrf.mxu0
  %v210 = vadd.f32 0.0, %v209
  %v211 = vpop.f32.mrf.mxu0
  %v212 = vpop.f32.mrf.mxu0
  %v213 = vadd.f32 0.0, %v212
  %v214 = vpop.f32.mrf.mxu0
  %215 = vdwg.mxu0
  %216 = vst [vmem:[%s2] sm:$0xff] %v154
  %217 = vst [vmem:[%s2 + $0x8] sm:$0xff] %v157
  %218 = vst [vmem:[%s2 + $0x10] sm:$0xff] %v162
  %219 = vst [vmem:[%s2 + $0x18] sm:$0xff] %v165
  %220 = vst [vmem:[%s2 + $0x20] sm:$0xff] %v170
  %221 = vst [vmem:[%s2 + $0x28] sm:$0xff] %v173
  %222 = vst [vmem:[%s2 + $0x30] sm:$0xff] %v178
  %223 = vst [vmem:[%s2 + $0x38] sm:$0xff] %v181
  %224 = vst [vmem:[%s2 + $0x40] sm:$0xff] %v186
  %225 = vst [vmem:[%s2 + $0x48] sm:$0xff] %v189
  %226 = vst [vmem:[%s2 + $0x50] sm:$0xff] %v194
  %227 = vst [vmem:[%s2 + $0x58] sm:$0xff] %v197
  %228 = vst [vmem:[%s2 + $0x60] sm:$0xff] %v202
  %229 = vst [vmem:[%s2 + $0x68] sm:$0xff] %v205
  %230 = vst [vmem:[%s2 + $0x70] sm:$0xff] %v210
  %231 = vst [vmem:[%s2 + $0x78] sm:$0xff] %v213
  %v232 = vadd.f32 %v154, %v157
  %v233 = vadd.f32 %v232, %v162
  %v234 = vadd.f32 %v233, %v165
  %v235 = vadd.f32 %v234, %v170
  %v236 = vadd.f32 %v235, %v173
  %v237 = vadd.f32 %v236, %v178
  %v238 = vadd.f32 %v237, %v181
  %v239 = vadd.f32 %v238, %v186
  %v240 = vadd.f32 %v239, %v189
  %v241 = vadd.f32 %v240, %v194
  %v242 = vadd.f32 %v241, %v197
  %v243 = vadd.f32 %v242, %v202
  %v244 = vadd.f32 %v243, %v205
  %v245 = vadd.f32 %v244, %v210
  %v246 = vadd.f32 %v245, %v213
  %v247 = vrot.slane %v246, 4
  %v248 = vadd.f32 %v246, %v247
  %v249 = vrot.slane %v248, 2
  %v250 = vadd.f32 %v248, %v249
  %v251 = vrot.slane %v250, 1
  %v252 = vadd.f32 %v250, %v251
  %v253 = vmul.f32 %v154, %v154
  %v254 = vmul.f32 %v157, %v157
  %v255 = vmul.f32 %v162, %v162
  %v256 = vmul.f32 %v165, %v165
  %v257 = vmul.f32 %v170, %v170
  %v258 = vmul.f32 %v173, %v173
  %v259 = vmul.f32 %v178, %v178
  %v260 = vmul.f32 %v181, %v181
  %v261 = vmul.f32 %v186, %v186
  %v262 = vmul.f32 %v189, %v189
  %v263 = vmul.f32 %v194, %v194
  %v264 = vmul.f32 %v197, %v197
  %v265 = vmul.f32 %v202, %v202
  %v266 = vmul.f32 %v205, %v205
  %v267 = vmul.f32 %v210, %v210
  %v268 = vmul.f32 %v213, %v213
  %v269 = vadd.f32 %v253, %v254
  %v270 = vadd.f32 %v269, %v255
  %v271 = vadd.f32 %v270, %v256
  %v272 = vadd.f32 %v271, %v257
  %v273 = vadd.f32 %v272, %v258
  %v274 = vadd.f32 %v273, %v259
  %v275 = vadd.f32 %v274, %v260
  %v276 = vadd.f32 %v275, %v261
  %v277 = vadd.f32 %v276, %v262
  %v278 = vadd.f32 %v277, %v263
  %v279 = vadd.f32 %v278, %v264
  %v280 = vadd.f32 %v279, %v265
  %v281 = vadd.f32 %v280, %v266
  %v282 = vadd.f32 %v281, %v267
  %v283 = vadd.f32 %v282, %v268
  %v284 = vrot.slane %v283, 4
  %v285 = vadd.f32 %v283, %v284
  %v286 = vrot.slane %v285, 2
  %v287 = vadd.f32 %v285, %v286
  %v288 = vrot.slane %v287, 1
  %v289 = vadd.f32 %v287, %v288
  %vm290 = vcmask 1040384
  %v291 = vsel %vm290, %v252, %v289
  %292 = vst [vmem:[%s3] sm:$0x3] %v291
  // Predicated region
  $region10: #{res_unit_forward.4} parent=0 // pred_check
    _
  $region11: #{res_unit_forward.4} parent=0 // pred_check_branch
    %294 = sbr.rel (0) target = $region13
  $region12: #{res_unit_forward.4} parent=0 // pred_region
    _
  $region13: #{res_unit_forward.4} parent=0 // pred_fallthru
    _
  // Predicated region
  $region14: #{res_unit_forward.4} parent=0 // pred_check
    _
  $region15: #{res_unit_forward.4} parent=0 // pred_check_branch
    %296 = sbr.rel (0) target = $region17
  $region16: #{res_unit_forward.4} parent=0 // pred_region
    _
  $region17: #{res_unit_forward.4} parent=0 // pred_fallthru
    _
  // Predicated region
  $region18: #{res_unit_forward.4} parent=0 // pred_check
    _
  $region19: #{res_unit_forward.4} parent=0 // pred_check_branch
    %298 = sbr.rel (0) target = $region21
  $region20: #{res_unit_forward.4} parent=0 // pred_region
    _
  $region21: #{res_unit_forward.4} parent=0 // pred_fallthru
    _
  // Predicated region
  $region22: #{res_unit_forward.4} parent=0 // pred_check
    _
  $region23: #{res_unit_forward.4} parent=0 // pred_check_branch
    %300 = sbr.rel (0) target = $region25
  $region24: #{res_unit_forward.4} parent=0 // pred_region
    _
  $region25: #{res_unit_forward.4} parent=0 // pred_fallthru
    _

// kernel: res_unit_forward.7
$region0: #{res_unit_forward.7}
  #allocation0 [shape = 'u32[]', space=smem, size = 0x4, offset = 0x4, fixed_abs, tag = 'smem constant byte address 0x4 - core index']
  #allocation1 [shape = 'u32[144,128]{1,0:T(1,128)}', space=vmem, size = 0x12000, scoped, tag = 'internal scratch']
  %s0 = inlined_call_operand.vmem [shape: f32[128,128], index: 0, kind: input, shape index: {}]
  %s1 = inlined_call_operand.vmem [shape: f32[128,128], index: 1, kind: input, shape index: {}]
  %s2 = inlined_call_operand.vmem [shape: f32[1,128], index: 2, kind: input, shape index: {}]
  %s3 = inlined_call_operand.vmem [shape: f32[1,128], index: 3, kind: input, shape index: {}]
  %s4 = inlined_call_operand.vmem [shape: f32[1,128], index: 4, kind: input, shape index: {}]
  %s5 = inlined_call_operand.vmem [shape: f32[1,128], index: 5, kind: input, shape index: {}]
  %s6 = inlined_call_operand.vmem [shape: f32[128,128], index: 6, kind: output, shape index: {}]
  %s7 = sld [smem:[#allocation0]]
  $region34: #{res_unit_forward.7} parent=0
    _
  %s9 = ssub.s32 1, %s7
  %s10 = scalar_select 0, %s9, %s7
  // Predicated region
  $region2: #{res_unit_forward.7} parent=0 // pred_check
    _
  $region3: #{res_unit_forward.7} parent=0 // pred_check_branch
    %12 = sbr.rel (0) target = $region5
  $region4: #{res_unit_forward.7} parent=0 // pred_region
    _
  $region5: #{res_unit_forward.7} parent=0 // pred_fallthru
    _
  // Predicated region
  $region6: #{res_unit_forward.7} parent=0 // pred_check
    _
  $region7: #{res_unit_forward.7} parent=0 // pred_check_branch
    %14 = sbr.rel (0) target = $region9
  $region8: #{res_unit_forward.7} parent=0 // pred_region
    _
  $region9: #{res_unit_forward.7} parent=0 // pred_fallthru
    _
  // Predicated region
  $region10: #{res_unit_forward.7} parent=0 // pred_check
    _
  $region11: #{res_unit_forward.7} parent=0 // pred_check_branch
    %16 = sbr.rel (0) target = $region13
  $region12: #{res_unit_forward.7} parent=0 // pred_region
    _
  $region13: #{res_unit_forward.7} parent=0 // pred_fallthru
    _
  // Predicated region
  $region14: #{res_unit_forward.7} parent=0 // pred_check
    _
  $region15: #{res_unit_forward.7} parent=0 // pred_check_branch
    %18 = sbr.rel (0) target = $region17
  $region16: #{res_unit_forward.7} parent=0 // pred_region
    _
  $region17: #{res_unit_forward.7} parent=0 // pred_fallthru
    _
  // Predicated region
  $region18: #{res_unit_forward.7} parent=0 // pred_check
    _
  $region19: #{res_unit_forward.7} parent=0 // pred_check_branch
    %20 = sbr.rel (0) target = $region21
  $region20: #{res_unit_forward.7} parent=0 // pred_region
    _
  $region21: #{res_unit_forward.7} parent=0 // pred_fallthru
    _
  // Predicated region
  $region22: #{res_unit_forward.7} parent=0 // pred_check
    _
  $region23: #{res_unit_forward.7} parent=0 // pred_check_branch
    %22 = sbr.rel (0) target = $region25
  $region24: #{res_unit_forward.7} parent=0 // pred_region
    _
  $region25: #{res_unit_forward.7} parent=0 // pred_fallthru
    _
  %v23 = vld [vmem:[%s0] sm:$0xff]
  %v24 = vld [vmem:[%s0 + $0x8] sm:$0xff]
  %v25 = vld [vmem:[%s0 + $0x10] sm:$0xff]
  %v26 = vld [vmem:[%s0 + $0x18] sm:$0xff]
  %v27 = vld [vmem:[%s0 + $0x20] sm:$0xff]
  %v28 = vld [vmem:[%s0 + $0x28] sm:$0xff]
  %v29 = vld [vmem:[%s0 + $0x30] sm:$0xff]
  %v30 = vld [vmem:[%s0 + $0x38] sm:$0xff]
  %v31 = vld [vmem:[%s0 + $0x40] sm:$0xff]
  %v32 = vld [vmem:[%s0 + $0x48] sm:$0xff]
  %v33 = vld [vmem:[%s0 + $0x50] sm:$0xff]
  %v34 = vld [vmem:[%s0 + $0x58] sm:$0xff]
  %v35 = vld [vmem:[%s0 + $0x60] sm:$0xff]
  %v36 = vld [vmem:[%s0 + $0x68] sm:$0xff]
  %v37 = vld [vmem:[%s0 + $0x70] sm:$0xff]
  %v38 = vld [vmem:[%s0 + $0x78] sm:$0xff]
  %v39 = vld [vmem:[%s2] sm:$0x1]
  %v41 = vlaneseq
  %v42 = vshrl.u32 %v41, 7
  %v43 = vsub.s32 0, %v42
  %v44 = vrot.slane %v39, %v43
  %v46 = vmul.f32 %v23, %v44
  %v47 = vmul.f32 %v24, %v44
  %v48 = vmul.f32 %v25, %v44
  %v49 = vmul.f32 %v26, %v44
  %v50 = vmul.f32 %v27, %v44
  %v51 = vmul.f32 %v28, %v44
  %v52 = vmul.f32 %v29, %v44
  %v53 = vmul.f32 %v30, %v44
  %v54 = vmul.f32 %v31, %v44
  %v55 = vmul.f32 %v32, %v44
  %v56 = vmul.f32 %v33, %v44
  %v57 = vmul.f32 %v34, %v44
  %v58 = vmul.f32 %v35, %v44
  %v59 = vmul.f32 %v36, %v44
  %v60 = vmul.f32 %v37, %v44
  %v61 = vmul.f32 %v38, %v44
  %v62 = vld [vmem:[%s3] sm:$0x1]
  %v64 = vlaneseq
  %v65 = vshrl.u32 %v64, 7
  %v66 = vsub.s32 0, %v65
  %v67 = vrot.slane %v62, %v66
  %v69 = vadd.f32 %v46, %v67
  %v70 = vadd.f32 %v47, %v67
  %v71 = vadd.f32 %v48, %v67
  %v72 = vadd.f32 %v49, %v67
  %v73 = vadd.f32 %v50, %v67
  %v74 = vadd.f32 %v51, %v67
  %v75 = vadd.f32 %v52, %v67
  %v76 = vadd.f32 %v53, %v67
  %v77 = vadd.f32 %v54, %v67
  %v78 = vadd.f32 %v55, %v67
  %v79 = vadd.f32 %v56, %v67
  %v80 = vadd.f32 %v57, %v67
  %v81 = vadd.f32 %v58, %v67
  %v82 = vadd.f32 %v59, %v67
  %v83 = vadd.f32 %v60, %v67
  %v84 = vadd.f32 %v61, %v67
  %v85 = vld [vmem:[%s1] sm:$0xff]
  %v86 = vld [vmem:[%s1 + $0x8] sm:$0xff]
  %v87 = vld [vmem:[%s1 + $0x10] sm:$0xff]
  %v88 = vld [vmem:[%s1 + $0x18] sm:$0xff]
  %v89 = vld [vmem:[%s1 + $0x20] sm:$0xff]
  %v90 = vld [vmem:[%s1 + $0x28] sm:$0xff]
  %v91 = vld [vmem:[%s1 + $0x30] sm:$0xff]
  %v92 = vld [vmem:[%s1 + $0x38] sm:$0xff]
  %v93 = vld [vmem:[%s1 + $0x40] sm:$0xff]
  %v94 = vld [vmem:[%s1 + $0x48] sm:$0xff]
  %v95 = vld [vmem:[%s1 + $0x50] sm:$0xff]
  %v96 = vld [vmem:[%s1 + $0x58] sm:$0xff]
  %v97 = vld [vmem:[%s1 + $0x60] sm:$0xff]
  %v98 = vld [vmem:[%s1 + $0x68] sm:$0xff]
  %v99 = vld [vmem:[%s1 + $0x70] sm:$0xff]
  %v100 = vld [vmem:[%s1 + $0x78] sm:$0xff]
  %v101 = vld [vmem:[%s4] sm:$0x1]
  %v103 = vlaneseq
  %v104 = vshrl.u32 %v103, 7
  %v105 = vsub.s32 0, %v104
  %v106 = vrot.slane %v101, %v105
  %v108 = vmul.f32 %v85, %v106
  %v109 = vmul.f32 %v86, %v106
  %v110 = vmul.f32 %v87, %v106
  %v111 = vmul.f32 %v88, %v106
  %v112 = vmul.f32 %v89, %v106
  %v113 = vmul.f32 %v90, %v106
  %v114 = vmul.f32 %v91, %v106
  %v115 = vmul.f32 %v92, %v106
  %v116 = vmul.f32 %v93, %v106
  %v117 = vmul.f32 %v94, %v106
  %v118 = vmul.f32 %v95, %v106
  %v119 = vmul.f32 %v96, %v106
  %v120 = vmul.f32 %v97, %v106
  %v121 = vmul.f32 %v98, %v106
  %v122 = vmul.f32 %v99, %v106
  %v123 = vmul.f32 %v100, %v106
  %v124 = vadd.f32 %v69, %v108
  %v125 = vadd.f32 %v70, %v109
  %v126 = vadd.f32 %v71, %v110
  %v127 = vadd.f32 %v72, %v111
  %v128 = vadd.f32 %v73, %v112
  %v129 = vadd.f32 %v74, %v113
  %v130 = vadd.f32 %v75, %v114
  %v131 = vadd.f32 %v76, %v115
  %v132 = vadd.f32 %v77, %v116
  %v133 = vadd.f32 %v78, %v117
  %v134 = vadd.f32 %v79, %v118
  %v135 = vadd.f32 %v80, %v119
  %v136 = vadd.f32 %v81, %v120
  %v137 = vadd.f32 %v82, %v121
  %v138 = vadd.f32 %v83, %v122
  %v139 = vadd.f32 %v84, %v123
  %v140 = vld [vmem:[%s5] sm:$0x1]
  %v142 = vlaneseq
  %v143 = vshrl.u32 %v142, 7
  %v144 = vsub.s32 0, %v143
  %v145 = vrot.slane %v140, %v144
  %v147 = vadd.f32 %v124, %v145
  %v148 = vadd.f32 %v125, %v145
  %v149 = vadd.f32 %v126, %v145
  %v150 = vadd.f32 %v127, %v145
  %v151 = vadd.f32 %v128, %v145
  %v152 = vadd.f32 %v129, %v145
  %v153 = vadd.f32 %v130, %v145
  %v154 = vadd.f32 %v131, %v145
  %v155 = vadd.f32 %v132, %v145
  %v156 = vadd.f32 %v133, %v145
  %v157 = vadd.f32 %v134, %v145
  %v158 = vadd.f32 %v135, %v145
  %v159 = vadd.f32 %v136, %v145
  %v160 = vadd.f32 %v137, %v145
  %v161 = vadd.f32 %v138, %v145
  %v162 = vadd.f32 %v139, %v145
  %v163 = vmax.f32 %v147, 0.0
  %v164 = vmax.f32 %v148, 0.0
  %v165 = vmax.f32 %v149, 0.0
  %v166 = vmax.f32 %v150, 0.0
  %v167 = vmax.f32 %v151, 0.0
  %v168 = vmax.f32 %v152, 0.0
  %v169 = vmax.f32 %v153, 0.0
  %v170 = vmax.f32 %v154, 0.0
  %v171 = vmax.f32 %v155, 0.0
  %v172 = vmax.f32 %v156, 0.0
  %v173 = vmax.f32 %v157, 0.0
  %v174 = vmax.f32 %v158, 0.0
  %v175 = vmax.f32 %v159, 0.0
  %v176 = vmax.f32 %v160, 0.0
  %v177 = vmax.f32 %v161, 0.0
  %v178 = vmax.f32 %v162, 0.0
  %179 = vst [vmem:[%s6] sm:$0xff] %v163
  %180 = vst [vmem:[%s6 + $0x8] sm:$0xff] %v164
  %181 = vst [vmem:[%s6 + $0x10] sm:$0xff] %v165
  %182 = vst [vmem:[%s6 + $0x18] sm:$0xff] %v166
  %183 = vst [vmem:[%s6 + $0x20] sm:$0xff] %v167
  %184 = vst [vmem:[%s6 + $0x28] sm:$0xff] %v168
  %185 = vst [vmem:[%s6 + $0x30] sm:$0xff] %v169
  %186 = vst [vmem:[%s6 + $0x38] sm:$0xff] %v170
  %187 = vst [vmem:[%s6 + $0x40] sm:$0xff] %v171
  %188 = vst [vmem:[%s6 + $0x48] sm:$0xff] %v172
  %189 = vst [vmem:[%s6 + $0x50] sm:$0xff] %v173
  %190 = vst [vmem:[%s6 + $0x58] sm:$0xff] %v174
  %191 = vst [vmem:[%s6 + $0x60] sm:$0xff] %v175
  %192 = vst [vmem:[%s6 + $0x68] sm:$0xff] %v176
  %193 = vst [vmem:[%s6 + $0x70] sm:$0xff] %v177
  %194 = vst [vmem:[%s6 + $0x78] sm:$0xff] %v178
  // Predicated region
  $region26: #{res_unit_forward.7} parent=0 // pred_check
    _
  $region27: #{res_unit_forward.7} parent=0 // pred_check_branch
    %196 = sbr.rel (0) target = $region29
  $region28: #{res_unit_forward.7} parent=0 // pred_region
    _
  $region29: #{res_unit_forward.7} parent=0 // pred_fallthru
    _
  // Predicated region
  $region30: #{res_unit_forward.7} parent=0 // pred_check
    _
  $region31: #{res_unit_forward.7} parent=0 // pred_check_branch
    %198 = sbr.rel (0) target = $region33
  $region32: #{res_unit_forward.7} parent=0 // pred_region
    _
  $region33: #{res_unit_forward.7} parent=0 // pred_fallthru
    _

// kernel: res_unit_forward.6
$region0: #{res_unit_forward.6}
  #allocation0 [shape = 'u32[]', space=smem, size = 0x4, offset = 0x4, fixed_abs, tag = 'smem constant byte address 0x4 - core index']
  #allocation1 [shape = 'u32[144,128]{1,0:T(1,128)}', space=vmem, size = 0x12000, scoped, tag = 'internal scratch']
  %s0 = inlined_call_operand.vmem [shape: bf16[128,72], index: 0, kind: input, shape index: {}]
  %s1 = inlined_call_operand.vmem [shape: bf16[72,128], index: 1, kind: input, shape index: {}]
  %s2 = inlined_call_operand.vmem [shape: bf16[128,4], index: 2, kind: input, shape index: {}]
  %s3 = inlined_call_operand.vmem [shape: bf16[4,128], index: 3, kind: input, shape index: {}]
  %s4 = inlined_call_operand.vmem [shape: f32[128,128], index: 4, kind: output, shape index: {0}]
  %s5 = inlined_call_operand.vmem [shape: f32[128,128], index: 5, kind: output, shape index: {1}]
  %s6 = inlined_call_operand.vmem [shape: f32[1,2,128], index: 6, kind: output, shape index: {2}]
  %s7 = inlined_call_operand.vmem [shape: f32[1,2,128], index: 7, kind: output, shape index: {3}]
  %8 = xla_tuple %s4, %s5, %s6, %s7
  %s9 = sld [smem:[#allocation0]]
  $region50: #{res_unit_forward.6} parent=0
    _
  %s11 = ssub.s32 1, %s9
  %s12 = scalar_select 0, %s11, %s9
  // Predicated region
  $region2: #{res_unit_forward.6} parent=0 // pred_check
    _
  $region3: #{res_unit_forward.6} parent=0 // pred_check_branch
    %14 = sbr.rel (0) target = $region5
  $region4: #{res_unit_forward.6} parent=0 // pred_region
    _
  $region5: #{res_unit_forward.6} parent=0 // pred_fallthru
    _
  // Predicated region
  $region6: #{res_unit_forward.6} parent=0 // pred_check
    _
  $region7: #{res_unit_forward.6} parent=0 // pred_check_branch
    %16 = sbr.rel (0) target = $region9
  $region8: #{res_unit_forward.6} parent=0 // pred_region
    _
  $region9: #{res_unit_forward.6} parent=0 // pred_fallthru
    _
  // Predicated region
  $region10: #{res_unit_forward.6} parent=0 // pred_check
    _
  $region11: #{res_unit_forward.6} parent=0 // pred_check_branch
    %18 = sbr.rel (0) target = $region13
  $region12: #{res_unit_forward.6} parent=0 // pred_region
    _
  $region13: #{res_unit_forward.6} parent=0 // pred_fallthru
    _
  // Predicated region
  $region14: #{res_unit_forward.6} parent=0 // pred_check
    _
  $region15: #{res_unit_forward.6} parent=0 // pred_check_branch
    %20 = sbr.rel (0) target = $region17
  $region16: #{res_unit_forward.6} parent=0 // pred_region
    _
  $region17: #{res_unit_forward.6} parent=0 // pred_fallthru
    _
  %v22 = vld [vmem:[%s0] sm:$0xf]
  %v23 = vld [vmem:[%s0 + $0x4] sm:$0xf]
  %v24 = vld [vmem:[%s0 + $0x8] sm:$0xf]
  %v25 = vld [vmem:[%s0 + $0xc] sm:$0xf]
  %v26 = vld [vmem:[%s0 + $0x10] sm:$0xf]
  %v27 = vld [vmem:[%s0 + $0x14] sm:$0xf]
  %v28 = vld [vmem:[%s0 + $0x18] sm:$0xf]
  %v29 = vld [vmem:[%s0 + $0x1c] sm:$0xf]
  %v30 = vld [vmem:[%s0 + $0x20] sm:$0xf]
  %v31 = vld [vmem:[%s0 + $0x24] sm:$0xf]
  %v32 = vld [vmem:[%s0 + $0x28] sm:$0xf]
  %v33 = vld [vmem:[%s0 + $0x2c] sm:$0xf]
  %v34 = vld [vmem:[%s0 + $0x30] sm:$0xf]
  %v35 = vld [vmem:[%s0 + $0x34] sm:$0xf]
  %v36 = vld [vmem:[%s0 + $0x38] sm:$0xf]
  %v37 = vld [vmem:[%s0 + $0x3c] sm:$0xf]
  %v38 = vld [vmem:[%s1] sm:$0xf]
  %v39 = vld [vmem:[%s1 + $0x4] sm:$0xf]
  %v40 = vld [vmem:[%s1 + $0x8] sm:$0xf]
  %v41 = vld [vmem:[%s1 + $0xc] sm:$0xf]
  %v42 = vld [vmem:[%s1 + $0x10] sm:$0xf]
  %v43 = vld [vmem:[%s1 + $0x14] sm:$0xf]
  %v44 = vld [vmem:[%s1 + $0x18] sm:$0xf]
  %v45 = vld [vmem:[%s1 + $0x1c] sm:$0xf]
  %v46 = vld [vmem:[%s1 + $0x20] sm:$0xf]
  %v63 = vunpack.c.l.b16 %v22
  %v64 = vunpack.c.l.b16 %v23
  %v65 = vunpack.c.l.b16 %v24
  %v66 = vunpack.c.l.b16 %v25
  %v67 = vunpack.c.l.b16 %v26
  %v68 = vunpack.c.l.b16 %v27
  %v69 = vunpack.c.l.b16 %v28
  %v70 = vunpack.c.l.b16 %v29
  %v71 = vunpack.c.l.b16 %v30
  %v72 = vunpack.c.l.b16 %v31
  %v73 = vunpack.c.l.b16 %v32
  %v74 = vunpack.c.l.b16 %v33
  %v75 = vunpack.c.l.b16 %v34
  %v76 = vunpack.c.l.b16 %v35
  %v77 = vunpack.c.l.b16 %v36
  %v78 = vunpack.c.l.b16 %v37
  %v79 = vpack.c.b16 %v64, %v63
  %v80 = vpack.c.b16 %v66, %v65
  %v81 = vpack.c.b16 %v68, %v67
  %v82 = vpack.c.b16 %v70, %v69
  %v83 = vpack.c.b16 %v72, %v71
  %v84 = vpack.c.b16 %v74, %v73
  %v85 = vpack.c.b16 %v76, %v75
  %v86 = vpack.c.b16 %v78, %v77
  %v96 = vunpack.c.l.b16 %v38
  %v97 = vunpack.c.l.b16 %v39
  %v98 = vunpack.c.l.b16 %v40
  %v99 = vunpack.c.l.b16 %v41
  %v100 = vunpack.c.l.b16 %v42
  %v101 = vunpack.c.l.b16 %v43
  %v102 = vunpack.c.l.b16 %v44
  %v103 = vunpack.c.l.b16 %v45
  %v104 = vunpack.c.l.b16 %v46
  %v105 = vpack.c.b16 %v97, %v96
  %v106 = vpack.c.b16 %v99, %v98
  %v107 = vpack.c.b16 %v101, %v100
  %v108 = vpack.c.b16 %v103, %v102
  %v109 = vpack.c.b16 %v104, %v104
  %vm114 = vcmask 588800
  %v116 = vsel %vm114, %v79, 0
  %v119 = vsel %vm114, %v80, 0
  %v122 = vsel %vm114, %v81, 0
  %v125 = vsel %vm114, %v82, 0
  %v128 = vsel %vm114, %v83, 0
  %v131 = vsel %vm114, %v84, 0
  %v134 = vsel %vm114, %v85, 0
  %v137 = vsel %vm114, %v86, 0
  %vm139 = vcmask 1043456
  %v141 = vsel %vm139, %v109, 0
  %143 = vmatprep.subr.bf16.mxu0 0
  %144 = vmatpush1.bf16.msra.mxu0 0
  %145 = vmatprep.subr.bf16.mxu0 0
  %146 = vmatpush1.bf16.msra.mxu0 0
  %147 = vmatprep.subr.bf16.mxu0 0
  %148 = vmatpush1.bf16.msra.mxu0 0
  %149 = vmatprep.subr.bf16.mxu0 0
  %150 = vmatpush1.bf16.msra.mxu0 %v141
  %151 = vmatprep.subr.bf16.mxu0 0
  %152 = vmatpush1.bf16.msra.mxu0 %v108
  %153 = vmatprep.subr.bf16.mxu0 0
  %154 = vmatpush1.bf16.msra.mxu0 %v107
  %155 = vmatprep.subr.bf16.mxu0 0
  %156 = vmatpush1.bf16.msra.mxu0 %v106
  %157 = vmatprep.subr.bf16.mxu0 0
  %158 = vmatpush1.bf16.msra.mxu0 %v105
  %159 = vmatprep.subr.bf16.mxu0 0
  %160 = vmatpush2.bf16.msra.mxu0 0
  %161 = vmatprep.subr.bf16.mxu0 0
  %162 = vmatpush2.bf16.msra.mxu0 0
  %163 = vmatprep.subr.bf16.mxu0 0
  %164 = vmatpush2.bf16.msra.mxu0 0
  %165 = vmatprep.subr.bf16.mxu0 0
  %166 = vmatpush2.bf16.msra.mxu0 0
  %167 = vmatprep.subr.bf16.mxu0 0
  %168 = vmatpush2.bf16.msra.mxu0 0
  %169 = vmatprep.subr.bf16.mxu0 0
  %170 = vmatpush2.bf16.msra.mxu0 0
  %171 = vmatprep.subr.bf16.mxu0 0
  %172 = vmatpush2.bf16.msra.mxu0 0
  %173 = vmatprep.subr.bf16.mxu0 0
  %174 = vmatpush2.bf16.msra.mxu0 0
  %175 = vmatprep.mubr.bf16.mxu0 0
  %176 = vmatmul.mubr.bf16.gmra.mxu0 %v116
  %v177 = vpop.f32.mrf.mxu0
  %v178 = vadd.f32 0.0, %v177
  %v179 = vpop.f32.mrf.mxu0
  %v180 = vpop.f32.mrf.mxu0
  %v181 = vadd.f32 0.0, %v180
  %v182 = vpop.f32.mrf.mxu0
  %183 = vmatprep.mubr.bf16.mxu0 0
  %184 = vmatmul.mubr.bf16.gmra.mxu0 %v119
  %v185 = vpop.f32.mrf.mxu0
  %v186 = vadd.f32 0.0, %v185
  %v187 = vpop.f32.mrf.mxu0
  %v188 = vpop.f32.mrf.mxu0
  %v189 = vadd.f32 0.0, %v188
  %v190 = vpop.f32.mrf.mxu0
  %191 = vmatprep.mubr.bf16.mxu0 0
  %192 = vmatmul.mubr.bf16.gmra.mxu0 %v122
  %v193 = vpop.f32.mrf.mxu0
  %v194 = vadd.f32 0.0, %v193
  %v195 = vpop.f32.mrf.mxu0
  %v196 = vpop.f32.mrf.mxu0
  %v197 = vadd.f32 0.0, %v196
  %v198 = vpop.f32.mrf.mxu0
  %199 = vmatprep.mubr.bf16.mxu0 0
  %200 = vmatmul.mubr.bf16.gmra.mxu0 %v125
  %v201 = vpop.f32.mrf.mxu0
  %v202 = vadd.f32 0.0, %v201
  %v203 = vpop.f32.mrf.mxu0
  %v204 = vpop.f32.mrf.mxu0
  %v205 = vadd.f32 0.0, %v204
  %v206 = vpop.f32.mrf.mxu0
  %207 = vmatprep.mubr.bf16.mxu0 0
  %208 = vmatmul.mubr.bf16.gmra.mxu0 %v128
  %v209 = vpop.f32.mrf.mxu0
  %v210 = vadd.f32 0.0, %v209
  %v211 = vpop.f32.mrf.mxu0
  %v212 = vpop.f32.mrf.mxu0
  %v213 = vadd.f32 0.0, %v212
  %v214 = vpop.f32.mrf.mxu0
  %215 = vmatprep.mubr.bf16.mxu0 0
  %216 = vmatmul.mubr.bf16.gmra.mxu0 %v131
  %v217 = vpop.f32.mrf.mxu0
  %v218 = vadd.f32 0.0, %v217
  %v219 = vpop.f32.mrf.mxu0
  %v220 = vpop.f32.mrf.mxu0
  %v221 = vadd.f32 0.0, %v220
  %v222 = vpop.f32.mrf.mxu0
  %223 = vmatprep.mubr.bf16.mxu0 0
  %224 = vmatmul.mubr.bf16.gmra.mxu0 %v134
  %v225 = vpop.f32.mrf.mxu0
  %v226 = vadd.f32 0.0, %v225
  %v227 = vpop.f32.mrf.mxu0
  %v228 = vpop.f32.mrf.mxu0
  %v229 = vadd.f32 0.0, %v228
  %v230 = vpop.f32.mrf.mxu0
  %231 = vmatprep.mubr.bf16.mxu0 0
  %232 = vmatmul.mubr.bf16.gmra.mxu0 %v137
  %v233 = vpop.f32.mrf.mxu0
  %v234 = vadd.f32 0.0, %v233
  %v235 = vpop.f32.mrf.mxu0
  %v236 = vpop.f32.mrf.mxu0
  %v237 = vadd.f32 0.0, %v236
  %v238 = vpop.f32.mrf.mxu0
  %239 = vdwg.mxu0
  %v240 = vld [vmem:[%s2] sm:$0xf]
  %v241 = vld [vmem:[%s2 + $0x4] sm:$0xf]
  %v242 = vld [vmem:[%s2 + $0x8] sm:$0xf]
  %v243 = vld [vmem:[%s2 + $0xc] sm:$0xf]
  %v244 = vld [vmem:[%s2 + $0x10] sm:$0xf]
  %v245 = vld [vmem:[%s2 + $0x14] sm:$0xf]
  %v246 = vld [vmem:[%s2 + $0x18] sm:$0xf]
  %v247 = vld [vmem:[%s2 + $0x1c] sm:$0xf]
  %v248 = vld [vmem:[%s2 + $0x20] sm:$0xf]
  %v249 = vld [vmem:[%s2 + $0x24] sm:$0xf]
  %v250 = vld [vmem:[%s2 + $0x28] sm:$0xf]
  %v251 = vld [vmem:[%s2 + $0x2c] sm:$0xf]
  %v252 = vld [vmem:[%s2 + $0x30] sm:$0xf]
  %v253 = vld [vmem:[%s2 + $0x34] sm:$0xf]
  %v254 = vld [vmem:[%s2 + $0x38] sm:$0xf]
  %v255 = vld [vmem:[%s2 + $0x3c] sm:$0xf]
  %v256 = vld [vmem:[%s3] sm:$0x3]
  %v273 = vunpack.c.l.b16 %v240
  %v274 = vunpack.c.l.b16 %v241
  %v275 = vunpack.c.l.b16 %v242
  %v276 = vunpack.c.l.b16 %v243
  %v277 = vunpack.c.l.b16 %v244
  %v278 = vunpack.c.l.b16 %v245
  %v279 = vunpack.c.l.b16 %v246
  %v280 = vunpack.c.l.b16 %v247
  %v281 = vunpack.c.l.b16 %v248
  %v282 = vunpack.c.l.b16 %v249
  %v283 = vunpack.c.l.b16 %v250
  %v284 = vunpack.c.l.b16 %v251
  %v285 = vunpack.c.l.b16 %v252
  %v286 = vunpack.c.l.b16 %v253
  %v287 = vunpack.c.l.b16 %v254
  %v288 = vunpack.c.l.b16 %v255
  %v289 = vpack.c.b16 %v274, %v273
  %v290 = vpack.c.b16 %v276, %v275
  %v291 = vpack.c.b16 %v278, %v277
  %v292 = vpack.c.b16 %v280, %v279
  %v293 = vpack.c.b16 %v282, %v281
  %v294 = vpack.c.b16 %v284, %v283
  %v295 = vpack.c.b16 %v286, %v285
  %v296 = vpack.c.b16 %v288, %v287
  %vm297 = vcmask 31744
  %v299 = vsel %vm297, %v289, 0
  %v302 = vsel %vm297, %v290, 0
  %v305 = vsel %vm297, %v291, 0
  %v308 = vsel %vm297, %v292, 0
  %v311 = vsel %vm297, %v293, 0
  %v314 = vsel %vm297, %v294, 0
  %v317 = vsel %vm297, %v295, 0
  %v320 = vsel %vm297, %v296, 0
  %vm322 = vcmask 1041408
  %v324 = vsel %vm322, %v256, 0
  %326 = vmatprep.subr.bf16.mxu0 0
  %327 = vmatpush1.bf16.msra.mxu0 0
  %328 = vmatprep.subr.bf16.mxu0 0
  %329 = vmatpush1.bf16.msra.mxu0 0
  %330 = vmatprep.subr.bf16.mxu0 0
  %331 = vmatpush1.bf16.msra.mxu0 0
  %332 = vmatprep.subr.bf16.mxu0 0
  %333 = vmatpush1.bf16.msra.mxu0 0
  %334 = vmatprep.subr.bf16.mxu0 0
  %335 = vmatpush1.bf16.msra.mxu0 0
  %336 = vmatprep.subr.bf16.mxu0 0
  %337 = vmatpush1.bf16.msra.mxu0 0
  %338 = vmatprep.subr.bf16.mxu0 0
  %339 = vmatpush1.bf16.msra.mxu0 0
  %340 = vmatprep.subr.bf16.mxu0 0
  %341 = vmatpush1.bf16.msra.mxu0 %v324
  %342 = vmatprep.subr.bf16.mxu0 0
  %343 = vmatpush2.bf16.msra.mxu0 0
  %344 = vmatprep.subr.bf16.mxu0 0
  %345 = vmatpush2.bf16.msra.mxu0 0
  %346 = vmatprep.subr.bf16.mxu0 0
  %347 = vmatpush2.bf16.msra.mxu0 0
  %348 = vmatprep.subr.bf16.mxu0 0
  %349 = vmatpush2.bf16.msra.mxu0 0
  %350 = vmatprep.subr.bf16.mxu0 0
  %351 = vmatpush2.bf16.msra.mxu0 0
  %352 = vmatprep.subr.bf16.mxu0 0
  %353 = vmatpush2.bf16.msra.mxu0 0
  %354 = vmatprep.subr.bf16.mxu0 0
  %355 = vmatpush2.bf16.msra.mxu0 0
  %356 = vmatprep.subr.bf16.mxu0 0
  %357 = vmatpush2.bf16.msra.mxu0 0
  %358 = vmatprep.mubr.bf16.mxu0 0
  %359 = vmatmul.mubr.bf16.gmra.mxu0 %v299
  %v360 = vpop.f32.mrf.mxu0
  %v361 = vadd.f32 0.0, %v360
  %v362 = vpop.f32.mrf.mxu0
  %v363 = vpop.f32.mrf.mxu0
  %v364 = vadd.f32 0.0, %v363
  %v365 = vpop.f32.mrf.mxu0
  %366 = vmatprep.mubr.bf16.mxu0 0
  %367 = vmatmul.mubr.bf16.gmra.mxu0 %v302
  %v368 = vpop.f32.mrf.mxu0
  %v369 = vadd.f32 0.0, %v368
  %v370 = vpop.f32.mrf.mxu0
  %v371 = vpop.f32.mrf.mxu0
  %v372 = vadd.f32 0.0, %v371
  %v373 = vpop.f32.mrf.mxu0
  %374 = vmatprep.mubr.bf16.mxu0 0
  %375 = vmatmul.mubr.bf16.gmra.mxu0 %v305
  %v376 = vpop.f32.mrf.mxu0
  %v377 = vadd.f32 0.0, %v376
  %v378 = vpop.f32.mrf.mxu0
  %v379 = vpop.f32.mrf.mxu0
  %v380 = vadd.f32 0.0, %v379
  %v381 = vpop.f32.mrf.mxu0
  %382 = vmatprep.mubr.bf16.mxu0 0
  %383 = vmatmul.mubr.bf16.gmra.mxu0 %v308
  %v384 = vpop.f32.mrf.mxu0
  %v385 = vadd.f32 0.0, %v384
  %v386 = vpop.f32.mrf.mxu0
  %v387 = vpop.f32.mrf.mxu0
  %v388 = vadd.f32 0.0, %v387
  %v389 = vpop.f32.mrf.mxu0
  %390 = vmatprep.mubr.bf16.mxu0 0
  %391 = vmatmul.mubr.bf16.gmra.mxu0 %v311
  %v392 = vpop.f32.mrf.mxu0
  %v393 = vadd.f32 0.0, %v392
  %v394 = vpop.f32.mrf.mxu0
  %v395 = vpop.f32.mrf.mxu0
  %v396 = vadd.f32 0.0, %v395
  %v397 = vpop.f32.mrf.mxu0
  %398 = vmatprep.mubr.bf16.mxu0 0
  %399 = vmatmul.mubr.bf16.gmra.mxu0 %v314
  %v400 = vpop.f32.mrf.mxu0
  %v401 = vadd.f32 0.0, %v400
  %v402 = vpop.f32.mrf.mxu0
  %v403 = vpop.f32.mrf.mxu0
  %v404 = vadd.f32 0.0, %v403
  %v405 = vpop.f32.mrf.mxu0
  %406 = vmatprep.mubr.bf16.mxu0 0
  %407 = vmatmul.mubr.bf16.gmra.mxu0 %v317
  %v408 = vpop.f32.mrf.mxu0
  %v409 = vadd.f32 0.0, %v408
  %v410 = vpop.f32.mrf.mxu0
  %v411 = vpop.f32.mrf.mxu0
  %v412 = vadd.f32 0.0, %v411
  %v413 = vpop.f32.mrf.mxu0
  %414 = vmatprep.mubr.bf16.mxu0 0
  %415 = vmatmul.mubr.bf16.gmra.mxu0 %v320
  %v416 = vpop.f32.mrf.mxu0
  %v417 = vadd.f32 0.0, %v416
  %v418 = vpop.f32.mrf.mxu0
  %v419 = vpop.f32.mrf.mxu0
  %v420 = vadd.f32 0.0, %v419
  %v421 = vpop.f32.mrf.mxu0
  %422 = vdwg.mxu0
  %423 = vst [vmem:[%s4] sm:$0xff] %v178
  %424 = vst [vmem:[%s4 + $0x8] sm:$0xff] %v181
  %425 = vst [vmem:[%s4 + $0x10] sm:$0xff] %v186
  %426 = vst [vmem:[%s4 + $0x18] sm:$0xff] %v189
  %427 = vst [vmem:[%s4 + $0x20] sm:$0xff] %v194
  %428 = vst [vmem:[%s4 + $0x28] sm:$0xff] %v197
  %429 = vst [vmem:[%s4 + $0x30] sm:$0xff] %v202
  %430 = vst [vmem:[%s4 + $0x38] sm:$0xff] %v205
  %431 = vst [vmem:[%s4 + $0x40] sm:$0xff] %v210
  %432 = vst [vmem:[%s4 + $0x48] sm:$0xff] %v213
  %433 = vst [vmem:[%s4 + $0x50] sm:$0xff] %v218
  %434 = vst [vmem:[%s4 + $0x58] sm:$0xff] %v221
  %435 = vst [vmem:[%s4 + $0x60] sm:$0xff] %v226
  %436 = vst [vmem:[%s4 + $0x68] sm:$0xff] %v229
  %437 = vst [vmem:[%s4 + $0x70] sm:$0xff] %v234
  %438 = vst [vmem:[%s4 + $0x78] sm:$0xff] %v237
  %439 = vst [vmem:[%s5] sm:$0xff] %v361
  %440 = vst [vmem:[%s5 + $0x8] sm:$0xff] %v364
  %441 = vst [vmem:[%s5 + $0x10] sm:$0xff] %v369
  %442 = vst [vmem:[%s5 + $0x18] sm:$0xff] %v372
  %443 = vst [vmem:[%s5 + $0x20] sm:$0xff] %v377
  %444 = vst [vmem:[%s5 + $0x28] sm:$0xff] %v380
  %445 = vst [vmem:[%s5 + $0x30] sm:$0xff] %v385
  %446 = vst [vmem:[%s5 + $0x38] sm:$0xff] %v388
  %447 = vst [vmem:[%s5 + $0x40] sm:$0xff] %v393
  %448 = vst [vmem:[%s5 + $0x48] sm:$0xff] %v396
  %449 = vst [vmem:[%s5 + $0x50] sm:$0xff] %v401
  %450 = vst [vmem:[%s5 + $0x58] sm:$0xff] %v404
  %451 = vst [vmem:[%s5 + $0x60] sm:$0xff] %v409
  %452 = vst [vmem:[%s5 + $0x68] sm:$0xff] %v412
  %453 = vst [vmem:[%s5 + $0x70] sm:$0xff] %v417
  %454 = vst [vmem:[%s5 + $0x78] sm:$0xff] %v420
  %v455 = vadd.f32 %v178, %v181
  %v456 = vadd.f32 %v455, %v186
  %v457 = vadd.f32 %v456, %v189
  %v458 = vadd.f32 %v457, %v194
  %v459 = vadd.f32 %v458, %v197
  %v460 = vadd.f32 %v459, %v202
  %v461 = vadd.f32 %v460, %v205
  %v462 = vadd.f32 %v461, %v210
  %v463 = vadd.f32 %v462, %v213
  %v464 = vadd.f32 %v463, %v218
  %v465 = vadd.f32 %v464, %v221
  %v466 = vadd.f32 %v465, %v226
  %v467 = vadd.f32 %v466, %v229
  %v468 = vadd.f32 %v467, %v234
  %v469 = vadd.f32 %v468, %v237
  %v470 = vrot.slane %v469, 4
  %v471 = vadd.f32 %v469, %v470
  %v472 = vrot.slane %v471, 2
  %v473 = vadd.f32 %v471, %v472
  %v474 = vrot.slane %v473, 1
  %v475 = vadd.f32 %v473, %v474
  %v476 = vmul.f32 %v178, %v178
  %v477 = vmul.f32 %v181, %v181
  %v478 = vmul.f32 %v186, %v186
  %v479 = vmul.f32 %v189, %v189
  %v480 = vmul.f32 %v194, %v194
  %v481 = vmul.f32 %v197, %v197
  %v482 = vmul.f32 %v202, %v202
  %v483 = vmul.f32 %v205, %v205
  %v484 = vmul.f32 %v210, %v210
  %v485 = vmul.f32 %v213, %v213
  %v486 = vmul.f32 %v218, %v218
  %v487 = vmul.f32 %v221, %v221
  %v488 = vmul.f32 %v226, %v226
  %v489 = vmul.f32 %v229, %v229
  %v490 = vmul.f32 %v234, %v234
  %v491 = vmul.f32 %v237, %v237
  %v492 = vadd.f32 %v476, %v477
  %v493 = vadd.f32 %v492, %v478
  %v494 = vadd.f32 %v493, %v479
  %v495 = vadd.f32 %v494, %v480
  %v496 = vadd.f32 %v495, %v481
  %v497 = vadd.f32 %v496, %v482
  %v498 = vadd.f32 %v497, %v483
  %v499 = vadd.f32 %v498, %v484
  %v500 = vadd.f32 %v499, %v485
  %v501 = vadd.f32 %v500, %v486
  %v502 = vadd.f32 %v501, %v487
  %v503 = vadd.f32 %v502, %v488
  %v504 = vadd.f32 %v503, %v489
  %v505 = vadd.f32 %v504, %v490
  %v506 = vadd.f32 %v505, %v491
  %v507 = vrot.slane %v506, 4
  %v508 = vadd.f32 %v506, %v507
  %v509 = vrot.slane %v508, 2
  %v510 = vadd.f32 %v508, %v509
  %v511 = vrot.slane %v510, 1
  %v512 = vadd.f32 %v510, %v511
  %vm513 = vcmask 1040384
  %v514 = vsel %vm513, %v475, %v512
  %515 = vst [vmem:[%s6] sm:$0x3] %v514
  %v516 = vadd.f32 %v361, %v364
  %v517 = vadd.f32 %v516, %v369
  %v518 = vadd.f32 %v517, %v372
  %v519 = vadd.f32 %v518, %v377
  %v520 = vadd.f32 %v519, %v380
  %v521 = vadd.f32 %v520, %v385
  %v522 = vadd.f32 %v521, %v388
  %v523 = vadd.f32 %v522, %v393
  %v524 = vadd.f32 %v523, %v396
  %v525 = vadd.f32 %v524, %v401
  %v526 = vadd.f32 %v525, %v404
  %v527 = vadd.f32 %v526, %v409
  %v528 = vadd.f32 %v527, %v412
  %v529 = vadd.f32 %v528, %v417
  %v530 = vadd.f32 %v529, %v420
  %v531 = vrot.slane %v530, 4
  %v532 = vadd.f32 %v530, %v531
  %v533 = vrot.slane %v532, 2
  %v534 = vadd.f32 %v532, %v533
  %v535 = vrot.slane %v534, 1
  %v536 = vadd.f32 %v534, %v535
  %v537 = vmul.f32 %v361, %v361
  %v538 = vmul.f32 %v364, %v364
  %v539 = vmul.f32 %v369, %v369
  %v540 = vmul.f32 %v372, %v372
  %v541 = vmul.f32 %v377, %v377
  %v542 = vmul.f32 %v380, %v380
  %v543 = vmul.f32 %v385, %v385
  %v544 = vmul.f32 %v388, %v388
  %v545 = vmul.f32 %v393, %v393
  %v546 = vmul.f32 %v396, %v396
  %v547 = vmul.f32 %v401, %v401
  %v548 = vmul.f32 %v404, %v404
  %v549 = vmul.f32 %v409, %v409
  %v550 = vmul.f32 %v412, %v412
  %v551 = vmul.f32 %v417, %v417
  %v552 = vmul.f32 %v420, %v420
  %v553 = vadd.f32 %v537, %v538
  %v554 = vadd.f32 %v553, %v539
  %v555 = vadd.f32 %v554, %v540
  %v556 = vadd.f32 %v555, %v541
  %v557 = vadd.f32 %v556, %v542
  %v558 = vadd.f32 %v557, %v543
  %v559 = vadd.f32 %v558, %v544
  %v560 = vadd.f32 %v559, %v545
  %v561 = vadd.f32 %v560, %v546
  %v562 = vadd.f32 %v561, %v547
  %v563 = vadd.f32 %v562, %v548
  %v564 = vadd.f32 %v563, %v549
  %v565 = vadd.f32 %v564, %v550
  %v566 = vadd.f32 %v565, %v551
  %v567 = vadd.f32 %v566, %v552
  %v568 = vrot.slane %v567, 4
  %v569 = vadd.f32 %v567, %v568
  %v570 = vrot.slane %v569, 2
  %v571 = vadd.f32 %v569, %v570
  %v572 = vrot.slane %v571, 1
  %v573 = vadd.f32 %v571, %v572
  %v574 = vsel %vm513, %v536, %v573
  %575 = vst [vmem:[%s7] sm:$0x3] %v574
  // Predicated region
  $region18: #{res_unit_forward.6} parent=0 // pred_check
    _
  $region19: #{res_unit_forward.6} parent=0 // pred_check_branch
    %577 = sbr.rel (0) target = $region21
  $region20: #{res_unit_forward.6} parent=0 // pred_region
    _
  $region21: #{res_unit_forward.6} parent=0 // pred_fallthru
    _
  // Predicated region
  $region22: #{res_unit_forward.6} parent=0 // pred_check
    _
  $region23: #{res_unit_forward.6} parent=0 // pred_check_branch
    %579 = sbr.rel (0) target = $region25
  $region24: #{res_unit_forward.6} parent=0 // pred_region
    _
  $region25: #{res_unit_forward.6} parent=0 // pred_fallthru
    _
  // Predicated region
  $region26: #{res_unit_forward.6} parent=0 // pred_check
    _
  $region27: #{res_unit_forward.6} parent=0 // pred_check_branch
    %581 = sbr.rel (0) target = $region29
  $region28: #{res_unit_forward.6} parent=0 // pred_region
    _
  $region29: #{res_unit_forward.6} parent=0 // pred_fallthru
    _
  // Predicated region
  $region30: #{res_unit_forward.6} parent=0 // pred_check
    _
  $region31: #{res_unit_forward.6} parent=0 // pred_check_branch
    %583 = sbr.rel (0) target = $region33
  $region32: #{res_unit_forward.6} parent=0 // pred_region
    _
  $region33: #{res_unit_forward.6} parent=0 // pred_fallthru
    _
  // Predicated region
  $region34: #{res_unit_forward.6} parent=0 // pred_check
    _
  $region35: #{res_unit_forward.6} parent=0 // pred_check_branch
    %585 = sbr.rel (0) target = $region37
  $region36: #{res_unit_forward.6} parent=0 // pred_region
    _
  $region37: #{res_unit_forward.6} parent=0 // pred_fallthru
    _
  // Predicated region
  $region38: #{res_unit_forward.6} parent=0 // pred_check
    _
  $region39: #{res_unit_forward.6} parent=0 // pred_check_branch
    %587 = sbr.rel (0) target = $region41
  $region40: #{res_unit_forward.6} parent=0 // pred_region
    _
  $region41: #{res_unit_forward.6} parent=0 // pred_fallthru
    _
  // Predicated region
  $region42: #{res_unit_forward.6} parent=0 // pred_check
    _
  $region43: #{res_unit_forward.6} parent=0 // pred_check_branch
    %589 = sbr.rel (0) target = $region45
  $region44: #{res_unit_forward.6} parent=0 // pred_region
    _
  $region45: #{res_unit_forward.6} parent=0 // pred_fallthru
    _
  // Predicated region
  $region46: #{res_unit_forward.6} parent=0 // pred_check
    _
  $region47: #{res_unit_forward.6} parent=0 // pred_check_branch
    %591 = sbr.rel (0) target = $region49
  $region48: #{res_unit_forward.6} parent=0 // pred_region
    _
  $region49: #{res_unit_forward.6} parent=0 // pred_fallthru
    _

</llo_original>
